<compile_context>
chip_gen: v7x
topology: tpu7x:2x2x1
jax: 0.10.0
libtpu: 0.0.40
codegen_flags: <defaults>
</compile_context>

<pallas_src>
import functools

import jax
import jax.numpy as jnp
from jax.experimental import pallas as pl
from jax.experimental.pallas import tpu as pltpu

_BIG = 1.0e6   # background penalty; only needs to dominate the max real squared distance
_TK = 256      # key-chunk rows per MXU push (multiple of 8)


def _surface_kernel(nk_ref, keys_ref, qry_ref, x_ref, y_ref, o_ref, min_ref, *, tk):
    # nk_ref  : (1,)       SMEM int32 — number of tk-row key chunks containing foreground rows
    # keys_ref: (T, 16)    bf16, foreground-sorted key features, resident across the grid:
    #                      [-2*q_n..-2*q_w, q^2 (4), 1,1,1,1, (1-y_q)*BIG, 0,0,0]
    # qry_ref : (16, TP)   bf16 query features for this block of points p:
    #                      [p_n..p_w, 1,1,1,1, p^2 (4), 1, 0,0,0]
    # x_ref   : (1, TP)    f32 logits for this block of points
    # y_ref   : (1, TP)    f32 {0,1} mask for this block of points
    # o_ref   : (1, 8, 128) f32 per-block partial sums: sublane k holds sum_k (bcast over lanes)
    #                      k = 0: sum(xs*y), 1: sum(xs), 2: sum(y), 3: sum(xs*edt)
    # min_ref : (8, TP)    f32 scratch — running per-query min of squared distances
    tp = min_ref.shape[-1]

    min_ref[...] = jnp.full((8, tp), 1.0e9, jnp.float32)
    q = qry_ref[...]            # load the query block once; reused by every key chunk
    nk = nk_ref[0]

    # Brute-force EDT, chunked along the key axis so the (tk, tp) matmul result is reduced
    # immediately (pure VPU min into an (8, tp) carry) instead of materializing (T, tp).
    @pl.loop(0, nk)
    def _(kc):
        start = pl.multiple_of(kc * tk, tk)
        kk = keys_ref[pl.ds(start, tk), :]                                   # (tk, 16) bf16
        d2 = jnp.dot(kk, q, preferred_element_type=jnp.float32)             # (tk, tp) f32
        m8 = jnp.min(d2.reshape(tk // 8, 8, tp), axis=0)                    # (8, tp), VPU only
        min_ref[...] = jnp.minimum(min_ref[...], m8)

    dmin = jnp.min(min_ref[...], axis=0, keepdims=True)                     # (1, tp), one XLU reduce
    edt = jnp.sqrt(jnp.maximum(dmin, 0.0))                                  # EUP, off critical path

    xs = jax.nn.sigmoid(x_ref[...])                                         # (1, tp) f32
    yb = y_ref[...]

    s_xy = jnp.sum(xs * yb)      # intersection  sum(sigmoid(x) * y)
    s_x = jnp.sum(xs)            # sum(sigmoid(x))
    s_y = jnp.sum(yb)            # sum(y)
    s_xe = jnp.sum(xs * edt)     # sum(sigmoid(x) * EDT)

    # Lane-dense, (8,128)-aligned partial-sum block; one value per sublane.
    sub = jax.lax.broadcasted_iota(jnp.int32, (8, 128), 0)
    packed = (jnp.where(sub == 0, s_xy, 0.0)
              + jnp.where(sub == 1, s_x, 0.0)
              + jnp.where(sub == 2, s_y, 0.0)
              + jnp.where(sub == 3, s_xe, 0.0))
    o_ref[...] = packed.reshape(1, 8, 128)


def surface_loss(x, y, *, tp=1024, tk=_TK):
    N, C, H, W = x.shape
    T = N * C * H * W
    tp = min(tp, T)
    assert T % tp == 0 and tp % 128 == 0, "flattened size must tile by a multiple of 128"
    assert T % tk == 0 and tk % 8 == 0, "key chunk must divide T and be a multiple of 8"
    G = T // tp  # kept >= 2 at this size so the query axis can use both TCs on v7x

    # 4-D integer coordinates of every element (row-major order matches reshape(T)).
    n_i, c_i, h_i, w_i = jnp.meshgrid(
        jnp.arange(N), jnp.arange(C), jnp.arange(H), jnp.arange(W), indexing="ij")
    p = jnp.stack([n_i, c_i, h_i, w_i], axis=-1).reshape(T, 4).astype(jnp.float32)

    y_flat = (y != 0).astype(jnp.float32).reshape(T)

    # Foreground compaction: sort key rows foreground-first (stable -> deterministic).  Only
    # the leading ceil(num_fg/tk) chunks are consumed in-kernel; the remaining (background)
    # rows carry a +BIG penalty and can never win the min, so skipping them is exact.
    order = jnp.argsort(-y_flat)
    p_s = p[order]
    y_s = y_flat[order].reshape(T, 1)

    ones4 = jnp.ones((T, 4), jnp.float32)
    zeros3 = jnp.zeros((T, 3), jnp.float32)

    # ||p-q||^2 = sum p_i^2 + sum q_i^2 - 2 sum p_i q_i; fold the norms, the -2 factor and the
    # background penalty into the operands (K padded to 16).  Coordinate entries (<= 225 here)
    # are exact in bf16 and bf16*bf16 products accumulate exactly in f32, so the real squared
    # distances are exact; the BIG sentinel only needs to dominate, not be exact.
    # TODO(synk): for much larger H/W/C/N, coordinate squares exceed bf16 exactness — split
    # coordinates or use f32 operands in that regime.
    keys = jnp.concatenate(
        [-2.0 * p_s, p_s * p_s, ones4, (1.0 - y_s) * _BIG, zeros3], axis=-1
    ).astype(jnp.bfloat16)                                                     # (T, 16)
    qrys = jnp.concatenate(
        [p, ones4, p * p, jnp.ones((T, 1), jnp.float32), zeros3], axis=-1
    ).T.astype(jnp.bfloat16)                                                   # (16, T)

    num_fg = jnp.sum(y_flat).astype(jnp.int32)
    nk = jnp.maximum((num_fg + tk - 1) // tk, 1).astype(jnp.int32).reshape(1)  # >=1 chunk

    x_row = x.astype(jnp.float32).reshape(1, T)   # (1, T): sublane block dim == full dim
    y_row = y_flat.reshape(1, T)

    partials = pl.pallas_call(
        functools.partial(_surface_kernel, tk=tk),
        out_shape=jax.ShapeDtypeStruct((G, 8, 128), jnp.float32),
        grid_spec=pltpu.PrefetchScalarGridSpec(
            num_scalar_prefetch=1,              # nk -> SMEM, passed to kernel + index_maps
            grid=(G,),
            in_specs=[
                pl.BlockSpec((T, 16), lambda i, nk_ref: (0, 0)),    # all key features, resident
                pl.BlockSpec((16, tp), lambda i, nk_ref: (0, i)),   # query-feature block
                pl.BlockSpec((1, tp), lambda i, nk_ref: (0, i)),    # logits block
                pl.BlockSpec((1, tp), lambda i, nk_ref: (0, i)),    # mask block
            ],
            out_specs=pl.BlockSpec((1, 8, 128), lambda i, nk_ref: (i, 0, 0)),
            scratch_shapes=[pltpu.VMEM((8, tp), jnp.float32)],       # running min of d2
        ),
        compiler_params=pltpu.CompilerParams(
            dimension_semantics=("parallel",),       # no cross-step carry -> megacore on v7x
            vmem_limit_bytes=32 * 1024 * 1024,       # chunked d2 keeps footprint ~3 MiB anyway
        ),
    )(nk, keys, qrys, x_row, y_row)

    sums = jnp.sum(partials[:, :4, 0], axis=0)       # reduce per-block partial sums
    sum_xy, sum_x, sum_y, sum_xe = sums[0], sums[1], sums[2], sums[3]

    # TODO(synk): the `Dice` class is not defined in the reference source; we assume the
    # standard soft-Dice loss  1 - (2*sum(x*y)+eps) / (sum(x)+sum(y)+eps)  with eps=1e-5.
    smooth = jnp.float32(1e-5)
    dice_loss = 1.0 - (2.0 * sum_xy + smooth) / (sum_x + sum_y + smooth)

    # TODO(synk): scipy's EDT of an all-True input (y with no foreground) is degenerate; we
    # zero the boundary term in that case instead of propagating the in-kernel sentinel.
    boundary = jnp.where(sum_y > 0, sum_xe / jnp.float32(T), 0.0)

    beta, alpha = 1.0, 0.5
    return beta * dice_loss + alpha * boundary


if __name__ == "__main__":
    key = jax.random.PRNGKey(0)
    kx, ky = jax.random.split(key)

    N, C, H, W = 2, 4, 16, 16
    x = jax.random.normal(kx, (N, C, H, W), dtype=jnp.float32)              # logits
    y = (jax.random.uniform(ky, (N, C, H, W)) > 0.8).astype(jnp.float32)    # binary mask

    loss = jax.jit(surface_loss)(x, y)
    jax.block_until_ready(loss)
    assert loss.shape == () and bool(jnp.isfinite(loss))
    print("KERNEL_OK")
</pallas_src>

<mosaic_0001>
module attributes {stable_mosaic.version = 11 : i64} {
  func.func private @main(%arg0: i32) attributes {dimension_semantics = [#tpu.dimension_semantics<core_parallel>], iteration_bounds = array<i64: 2>, tpu.core_type = #tpu.core_type<sc_scalar_subcore>, window_params = []} {
    return
  }
}

module attributes {stable_mosaic.version = 11 : i64} {
  func.func private @main(%arg0: i32) attributes {dimension_semantics = [#tpu.dimension_semantics<core_parallel>], iteration_bounds = array<i64: 2>, tpu.core_type = #tpu.core_type<sc_scalar_subcore>, window_params = []} {
    return
  }
}

module attributes {stable_mosaic.version = 11 : i64} {
  func.func @_surface_kernel(%arg0: i32, %arg1: memref<1xi32, #tpu.memory_space<smem>>, %arg2: memref<2048x16xbf16, #tpu.memory_space<vmem>>, %arg3: memref<16x1024xbf16, #tpu.memory_space<vmem>>, %arg4: memref<1x1024xf32, #tpu.memory_space<vmem>>, %arg5: memref<1x1024xf32, #tpu.memory_space<vmem>>, %arg6: memref<1x8x128xf32, #tpu.memory_space<vmem>>, %arg7: memref<8x1024xf32, #tpu.memory_space<vmem>>) attributes {dimension_semantics = [#tpu.dimension_semantics<parallel>], iteration_bounds = array<i64: 2>, scalar_prefetch = 1 : i64, scratch_operands = 1 : i64, tpu.core_type = #tpu.core_type<tc>, window_params = [{pipeline_mode = #tpu.pipeline_mode<synchronous>, transform_indices = @transform_0, window_bounds = array<i64: 2048, 16>}, {transform_indices = @transform_1, window_bounds = array<i64: 16, 1024>}, {transform_indices = @transform_2, window_bounds = array<i64: 1, 1024>}, {transform_indices = @transform_3, window_bounds = array<i64: 1, 1024>}, {transform_indices = @transform_4, window_bounds = array<i64: 1, 8, 128>}]} {
    %cst = arith.constant 1.000000e+09 : f32
    %0 = vector.broadcast %cst : f32 to vector<8x1024xf32>
    %c0 = arith.constant 0 : index
    %c0_0 = arith.constant 0 : index
    %1 = vector.load %arg7[%c0, %c0_0] : memref<8x1024xf32, #tpu.memory_space<vmem>>, vector<8x1024xf32>
    tpu.vector_store %arg7[%c0, %c0_0], %0 {strides = array<i32>} : memref<8x1024xf32, #tpu.memory_space<vmem>>, vector<8x1024xf32>,
    %c0_1 = arith.constant 0 : index
    %c0_2 = arith.constant 0 : index
    %2 = vector.load %arg3[%c0_1, %c0_2] : memref<16x1024xbf16, #tpu.memory_space<vmem>>, vector<16x1024xbf16>
    %c0_3 = arith.constant 0 : index
    %3 = memref.load %arg1[%c0_3] : memref<1xi32, #tpu.memory_space<smem>>
    %c0_i32 = arith.constant 0 : i32
    %4 = arith.subi %3, %c0_i32 : i32
    %c1_i32 = arith.constant 1 : i32
    %c1_i32_4 = arith.constant 1 : i32
    %5 = arith.subi %c1_i32, %c1_i32_4 : i32
    %6 = arith.addi %4, %5 : i32
    %c1_i32_5 = arith.constant 1 : i32
    %7 = arith.divsi %6, %c1_i32_5 : i32
    %c1_i32_6 = arith.constant 1 : i32
    %c0_i32_7 = arith.constant 0 : i32
    %c0_i32_8 = arith.constant 0 : i32
    %8 = arith.subi %7, %c0_i32_8 : i32
    %9 = arith.addi %c0_i32_8, %8 : i32
    %c1_i32_9 = arith.constant 1 : i32
    scf.for %arg8 = %c0_i32_8 to %9 step %c1_i32_9  : i32 {
      %67 = arith.muli %arg8, %c1_i32_6 : i32
      %68 = arith.addi %c0_i32_7, %67 : i32
      %c256_i32 = arith.constant 256 : i32
      %69 = arith.muli %68, %c256_i32 : i32
      %70 = tpu.assume_multiple %69, 256 : i32
      %71 = arith.index_cast %70 : i32 to index
      %c0_32 = arith.constant 0 : index
      %72 = vector.load %arg2[%71, %c0_32] : memref<2048x16xbf16, #tpu.memory_space<vmem>>, vector<256x16xbf16>
      %cst_33 = arith.constant dense<0.000000e+00> : vector<256x1024xf32>
      %73 = tpu.matmul %72, %2, %cst_33 {dimension_numbers = #tpu.dot_dimension_numbers<[1], [0], [0], [1], [0, 0, 1, 1], [], []>} : vector<256x16xbf16>, vector<16x1024xbf16>, vector<256x1024xf32> -> vector<256x1024xf32>
      %74 = vector.shape_cast %73 : vector<256x1024xf32> to vector<32x8x1024xf32>
      %cst_34 = arith.constant dense<0x7F800000> : vector<8x1024xf32>
      %75 = vector.multi_reduction <minimumf>, %74, %cst_34 [0] : vector<32x8x1024xf32> to vector<8x1024xf32>
      %c0_35 = arith.constant 0 : index
      %c0_36 = arith.constant 0 : index
      %76 = vector.load %arg7[%c0_35, %c0_36] : memref<8x1024xf32, #tpu.memory_space<vmem>>, vector<8x1024xf32>
      %77 = arith.minimumf %76, %75 : vector<8x1024xf32>
      %c0_37 = arith.constant 0 : index
      %c0_38 = arith.constant 0 : index
      %78 = vector.load %arg7[%c0_37, %c0_38] : memref<8x1024xf32, #tpu.memory_space<vmem>>, vector<8x1024xf32>
      tpu.vector_store %arg7[%c0_37, %c0_38], %77 {strides = array<i32>} : memref<8x1024xf32, #tpu.memory_space<vmem>>, vector<8x1024xf32>,
    }
    %c0_10 = arith.constant 0 : index
    %c0_11 = arith.constant 0 : index
    %10 = vector.load %arg7[%c0_10, %c0_11] : memref<8x1024xf32, #tpu.memory_space<vmem>>, vector<8x1024xf32>
    %cst_12 = arith.constant dense<0x7F800000> : vector<1024xf32>
    %11 = vector.multi_reduction <minimumf>, %10, %cst_12 [0] : vector<8x1024xf32> to vector<1024xf32>
    %12 = vector.shape_cast %11 : vector<1024xf32> to vector<1x1024xf32>
    %cst_13 = arith.constant 0.000000e+00 : f32
    %13 = vector.broadcast %cst_13 : f32 to vector<1x1024xf32>
    %14 = arith.maximumf %12, %13 : vector<1x1024xf32>
    %15 = math.sqrt %14 : vector<1x1024xf32>
    %c0_14 = arith.constant 0 : index
    %c0_15 = arith.constant 0 : index
    %16 = vector.load %arg4[%c0_14, %c0_15] : memref<1x1024xf32, #tpu.memory_space<vmem>>, vector<1x1024xf32>
    %17 = arith.negf %16 : vector<1x1024xf32>
    %18 = math.exp %17 : vector<1x1024xf32>
    %cst_16 = arith.constant 1.000000e+00 : f32
    %19 = vector.broadcast %cst_16 : f32 to vector<1x1024xf32>
    %20 = arith.addf %19, %18 : vector<1x1024xf32>
    %21 = arith.divf %19, %20 : vector<1x1024xf32>
    %c0_17 = arith.constant 0 : index
    %c0_18 = arith.constant 0 : index
    %22 = vector.load %arg5[%c0_17, %c0_18] : memref<1x1024xf32, #tpu.memory_space<vmem>>, vector<1x1024xf32>
    %23 = arith.mulf %21, %22 : vector<1x1024xf32>
    %24 = vector.shape_cast %23 : vector<1x1024xf32> to vector<1x1x1024xf32>
    %cst_19 = arith.constant dense<0.000000e+00> : vector<1xf32>
    %25 = vector.multi_reduction <add>, %24, %cst_19 [1, 2] : vector<1x1x1024xf32> to vector<1xf32>
    %26 = vector.shape_cast %25 : vector<1xf32> to vector<1x1x1xf32>
    %27 = vector.extract %26[0, 0, 0] : f32 from vector<1x1x1xf32>
    %28 = vector.shape_cast %21 : vector<1x1024xf32> to vector<1x1x1024xf32>
    %cst_20 = arith.constant dense<0.000000e+00> : vector<1xf32>
    %29 = vector.multi_reduction <add>, %28, %cst_20 [1, 2] : vector<1x1x1024xf32> to vector<1xf32>
    %30 = vector.shape_cast %29 : vector<1xf32> to vector<1x1x1xf32>
    %31 = vector.extract %30[0, 0, 0] : f32 from vector<1x1x1xf32>
    %32 = vector.shape_cast %22 : vector<1x1024xf32> to vector<1x1x1024xf32>
    %cst_21 = arith.constant dense<0.000000e+00> : vector<1xf32>
    %33 = vector.multi_reduction <add>, %32, %cst_21 [1, 2] : vector<1x1x1024xf32> to vector<1xf32>
    %34 = vector.shape_cast %33 : vector<1xf32> to vector<1x1x1xf32>
    %35 = vector.extract %34[0, 0, 0] : f32 from vector<1x1x1xf32>
    %36 = arith.mulf %21, %15 : vector<1x1024xf32>
    %37 = vector.shape_cast %36 : vector<1x1024xf32> to vector<1x1x1024xf32>
    %cst_22 = arith.constant dense<0.000000e+00> : vector<1xf32>
    %38 = vector.multi_reduction <add>, %37, %cst_22 [1, 2] : vector<1x1x1024xf32> to vector<1xf32>
    %39 = vector.shape_cast %38 : vector<1xf32> to vector<1x1x1xf32>
    %40 = vector.extract %39[0, 0, 0] : f32 from vector<1x1x1xf32>
    %41 = tpu.iota {dimensions = array<i32: 0>} : vector<8x128xi32>
    %c0_i32_23 = arith.constant 0 : i32
    %42 = vector.broadcast %c0_i32_23 : i32 to vector<8x128xi32>
    %43 = arith.cmpi eq, %41, %42 : vector<8x128xi32>
    %cst_24 = arith.constant 0.000000e+00 : f32
    %44 = vector.broadcast %27 : f32 to vector<8x128xf32>
    %45 = vector.broadcast %cst_24 : f32 to vector<8x128xf32>
    %46 = arith.select %43, %44, %45 : vector<8x128xi1>, vector<8x128xf32>
    %c1_i32_25 = arith.constant 1 : i32
    %47 = vector.broadcast %c1_i32_25 : i32 to vector<8x128xi32>
    %48 = arith.cmpi eq, %41, %47 : vector<8x128xi32>
    %cst_26 = arith.constant 0.000000e+00 : f32
    %49 = vector.broadcast %31 : f32 to vector<8x128xf32>
    %50 = vector.broadcast %cst_26 : f32 to vector<8x128xf32>
    %51 = arith.select %48, %49, %50 : vector<8x128xi1>, vector<8x128xf32>
    %52 = arith.addf %46, %51 : vector<8x128xf32>
    %c2_i32 = arith.constant 2 : i32
    %53 = vector.broadcast %c2_i32 : i32 to vector<8x128xi32>
    %54 = arith.cmpi eq, %41, %53 : vector<8x128xi32>
    %cst_27 = arith.constant 0.000000e+00 : f32
    %55 = vector.broadcast %35 : f32 to vector<8x128xf32>
    %56 = vector.broadcast %cst_27 : f32 to vector<8x128xf32>
    %57 = arith.select %54, %55, %56 : vector<8x128xi1>, vector<8x128xf32>
    %58 = arith.addf %52, %57 : vector<8x128xf32>
    %c3_i32 = arith.constant 3 : i32
    %59 = vector.broadcast %c3_i32 : i32 to vector<8x128xi32>
    %60 = arith.cmpi eq, %41, %59 : vector<8x128xi32>
    %cst_28 = arith.constant 0.000000e+00 : f32
    %61 = vector.broadcast %40 : f32 to vector<8x128xf32>
    %62 = vector.broadcast %cst_28 : f32 to vector<8x128xf32>
    %63 = arith.select %60, %61, %62 : vector<8x128xi1>, vector<8x128xf32>
    %64 = arith.addf %58, %63 : vector<8x128xf32>
    %65 = vector.shape_cast %64 : vector<8x128xf32> to vector<1x8x128xf32>
    %c0_29 = arith.constant 0 : index
    %c0_30 = arith.constant 0 : index
    %c0_31 = arith.constant 0 : index
    %66 = vector.load %arg6[%c0_29, %c0_30, %c0_31] : memref<1x8x128xf32, #tpu.memory_space<vmem>>, vector<1x8x128xf32>
    tpu.vector_store %arg6[%c0_29, %c0_30, %c0_31], %65 {strides = array<i32>} : memref<1x8x128xf32, #tpu.memory_space<vmem>>, vector<1x8x128xf32>,
    return
  }
  func.func @transform_0(%arg0: i32, %arg1: memref<1xi32, #tpu.memory_space<smem>>) -> (i32, i32) {
    %c0_i32 = arith.constant 0 : i32
    %c0_i32_0 = arith.constant 0 : i32
    %c0_i32_1 = arith.constant 0 : i32
    return %c0_i32, %c0_i32_0 : i32, i32
  }
  func.func @transform_1(%arg0: i32, %arg1: memref<1xi32, #tpu.memory_space<smem>>) -> (i32, i32) {
    %c0_i32 = arith.constant 0 : i32
    %c0_i32_0 = arith.constant 0 : i32
    return %c0_i32, %arg0 : i32, i32
  }
  func.func @transform_2(%arg0: i32, %arg1: memref<1xi32, #tpu.memory_space<smem>>) -> (i32, i32) {
    %c0_i32 = arith.constant 0 : i32
    %c0_i32_0 = arith.constant 0 : i32
    return %c0_i32, %arg0 : i32, i32
  }
  func.func @transform_3(%arg0: i32, %arg1: memref<1xi32, #tpu.memory_space<smem>>) -> (i32, i32) {
    %c0_i32 = arith.constant 0 : i32
    %c0_i32_0 = arith.constant 0 : i32
    return %c0_i32, %arg0 : i32, i32
  }
  func.func @transform_4(%arg0: i32, %arg1: memref<1xi32, #tpu.memory_space<smem>>) -> (i32, i32, i32) {
    %c0_i32 = arith.constant 0 : i32
    %c0_i32_0 = arith.constant 0 : i32
    %c0_i32_1 = arith.constant 0 : i32
    return %arg0, %c0_i32, %c0_i32_0 : i32, i32, i32
  }
}

</mosaic_0001>

<llo_original>
// kernel: neg.1
$region0: #{neg.1}
  #allocation0 [shape = 's32[1]{0}', space=sflag, size = 0x4, scoped, tag = 'scoped memory for neg.1']
  %s0 = inlined_call_operand.vmem [shape: f32[2048], index: 0, kind: input, shape index: {}]
  %s1 = inlined_call_operand.vmem [shape: f32[2048], index: 1, kind: output, shape index: {}]
  %v2 = vld [vmem:[%s0] sm:$0xff]
  %3 = xla_tuple %v2
  %4 = xla_tuple %3
  %v5 = vxor.u32 %v2, 2147483648
  %6 = xla_tuple %v5
  %7 = vst [vmem:[%s1] sm:$0xff] %v5
  %s8 = scalar_lea.vmem %s0, 8
  %v9 = vld [vmem:[%s8] sm:$0xff]
  %10 = xla_tuple %v9
  %11 = xla_tuple %10
  %v12 = vxor.u32 %v9, 2147483648
  %13 = xla_tuple %v12
  %s14 = scalar_lea.vmem %s1, 8
  %15 = vst [vmem:[%s14] sm:$0xff] %v12

// kernel: surface_loss.1
$region0: #{surface_loss.1}
  #allocation0 [shape = 'u32[]', space=smem, size = 0x4, offset = 0x4, fixed_abs, tag = 'smem constant byte address 0x4 - core index']
  #allocation1 [shape = 'u32[144,128]{1,0:T(1,128)}', space=vmem, size = 0x12000, scoped, tag = 'internal scratch']
  #allocation2 [shape = 'f32[8,1024]{1,0:T(8,128)}', space=vmem, size = 0x8000, scoped, tag = 'scratch operand']
  #allocation3 [shape = 's32[1]{0}', space=sflag, size = 0x4, scoped, tag = 'scoped memory for surface_loss.1']
  #allocation4 [shape = 's32[1]{0:T(128)S(6)}', space=smem, size = 0x200, scoped, tag = 'prefetched SMEM operand 0']
  %s0 = inlined_call_operand.<no memory space> [shape: s32[1], index: 0, kind: input, shape index: {}]
  %s1 = inlined_call_operand.vmem [shape: bf16[2048,16], index: 1, kind: input, shape index: {}]
  %s2 = inlined_call_operand.vmem [shape: bf16[16,2048], index: 2, kind: input, shape index: {}]
  %s3 = inlined_call_operand.vmem [shape: f32[1,2048], index: 3, kind: input, shape index: {}]
  %s4 = inlined_call_operand.vmem [shape: f32[1,2048], index: 4, kind: input, shape index: {}]
  %s5 = inlined_call_operand.vmem [shape: f32[2,8,128], index: 5, kind: output, shape index: {}]
  %s6 = sld [smem:[#allocation0]]
  $region79: #{surface_loss.1} parent=0
    _
  %s8 = ssub.s32 1, %s6
  %s9 = scalar_select 0, %s8, %s6
  %10 = sst [smem:[#allocation4]] %s0
  $region1: #{surface_loss.1} parent=0
    #allocation5 [shape = 'u8[65536]{0}', space=vmem, size = 0x10000, scoped, tag = 'input window, operand 2']
    loop: start=0, step=1, limit=4
    $region2: #{surface_loss.1} parent=1 // loop_pre_header
      _
    $region3: #{surface_loss.1} parent=1 // loop_header
      %s12 = sphi 0, %s16
      %p13 = scmp.ge.s32.totalorder %s12, 4
      %s20 = sphi 0, %s20
      %s22 = sphi 0, %s20
      %s23 = sphi 0, %s22
      %s37 = sphi 0, %s23
      %s43 = sphi 0, %s45
      %s46 = sphi 0, %s43
      %s47 = sphi 0, %s46
      %s63 = sphi 0, %s47
      %s69 = sphi 0, %s71
      %s72 = sphi 0, %s69
      %s73 = sphi 0, %s72
      %s89 = sphi 0, %s73
      %s95 = sphi 0, %s97
      %s98 = sphi 0, %s95
      %s99 = sphi 0, %s98
      %s115 = sphi 0, %s99
      %s121 = sphi 0, %s123
      %s124 = sphi 0, %s121
      %s125 = sphi 0, %s124
      %s141 = sphi 0, %s125
    $region4: #{surface_loss.1} parent=1 // loop_header_branch
      %15 = sbr.rel (%p13) target = $region8
    $region5: #{surface_loss.1} parent=1 // loop_body
      %s17 = ssub.s32 %s12, 1
      %s18 = ssub.s32 %s12, 2
      %s19 = sadd.s32 %s12, 1
      %s21 = sadd.s32 %s20, 1
      %p24 = scmp.eq.s32.totalorder %s12, 1
      %p25 = scmp.ne.s32.totalorder %s20, %s22
      %p26 = scmp.eq.s32.totalorder %s12, 0
      %p27 = por %p25, %p26
      %p28 = scmp.ne.s32.totalorder %s20, %s22
      %p29 = scmp.eq.s32.totalorder %s17, 1
      %p30 = por %p28, %p29
      %p31 = scmp.ne.s32.totalorder %s22, %s23
      %p32 = scmp.eq.s32.totalorder %s17, 0
      %p33 = por %p31, %p32
      %p34 = scmp.ne.s32.totalorder %s22, %s23
      %p35 = scmp.eq.s32.totalorder %s18, 1
      %p36 = por %p34, %p35
      %p38 = scmp.ne.s32.totalorder %s23, %s37
      %p39 = scmp.eq.s32.totalorder %s18, 0
      %p40 = por %p38, %p39
      %s41 = ssub.s32 %s12, %s19
      %p42 = scmp.eq.s32.totalorder %s41, 0
      %s44 = sadd.s32 %s43, 1
      %s45 = scalar_select %p42, %s43, %s44
      %p48 = pneg %p42
      %p49 = scmp.eq.s32.totalorder %s12, 1
      %p50 = por %p48, %p49
      %p51 = scmp.ne.s32.totalorder %s43, %s46
      %p52 = scmp.eq.s32.totalorder %s12, 0
      %p53 = por %p51, %p52
      %p54 = scmp.ne.s32.totalorder %s43, %s46
      %p55 = scmp.eq.s32.totalorder %s17, 1
      %p56 = por %p54, %p55
      %p57 = scmp.ne.s32.totalorder %s46, %s47
      %p58 = scmp.eq.s32.totalorder %s17, 0
      %p59 = por %p57, %p58
      %p60 = scmp.ne.s32.totalorder %s46, %s47
      %p61 = scmp.eq.s32.totalorder %s18, 1
      %p62 = por %p60, %p61
      %p64 = scmp.ne.s32.totalorder %s47, %s63
      %p65 = scmp.eq.s32.totalorder %s18, 0
      %p66 = por %p64, %p65
      %s67 = ssub.s32 %s12, %s19
      %p68 = scmp.eq.s32.totalorder %s67, 0
      %s70 = sadd.s32 %s69, 1
      %s71 = scalar_select %p68, %s69, %s70
      %p74 = pneg %p68
      %p75 = scmp.eq.s32.totalorder %s12, 1
      %p76 = por %p74, %p75
      %p77 = scmp.ne.s32.totalorder %s69, %s72
      %p78 = scmp.eq.s32.totalorder %s12, 0
      %p79 = por %p77, %p78
      %p80 = scmp.ne.s32.totalorder %s69, %s72
      %p81 = scmp.eq.s32.totalorder %s17, 1
      %p82 = por %p80, %p81
      %p83 = scmp.ne.s32.totalorder %s72, %s73
      %p84 = scmp.eq.s32.totalorder %s17, 0
      %p85 = por %p83, %p84
      %p86 = scmp.ne.s32.totalorder %s72, %s73
      %p87 = scmp.eq.s32.totalorder %s18, 1
      %p88 = por %p86, %p87
      %p90 = scmp.ne.s32.totalorder %s73, %s89
      %p91 = scmp.eq.s32.totalorder %s18, 0
      %p92 = por %p90, %p91
      %s93 = ssub.s32 %s12, %s19
      %p94 = scmp.eq.s32.totalorder %s93, 0
      %s96 = sadd.s32 %s95, 1
      %s97 = scalar_select %p94, %s95, %s96
      %p100 = pneg %p94
      %p101 = scmp.eq.s32.totalorder %s12, 1
      %p102 = por %p100, %p101
      %p103 = scmp.ne.s32.totalorder %s95, %s98
      %p104 = scmp.eq.s32.totalorder %s12, 0
      %p105 = por %p103, %p104
      %p106 = scmp.ne.s32.totalorder %s95, %s98
      %p107 = scmp.eq.s32.totalorder %s17, 1
      %p108 = por %p106, %p107
      %p109 = scmp.ne.s32.totalorder %s98, %s99
      %p110 = scmp.eq.s32.totalorder %s17, 0
      %p111 = por %p109, %p110
      %p112 = scmp.ne.s32.totalorder %s98, %s99
      %p113 = scmp.eq.s32.totalorder %s18, 1
      %p114 = por %p112, %p113
      %p116 = scmp.ne.s32.totalorder %s99, %s115
      %p117 = scmp.eq.s32.totalorder %s18, 0
      %p118 = por %p116, %p117
      %s119 = ssub.s32 %s12, %s19
      %p120 = scmp.eq.s32.totalorder %s119, 0
      %s122 = sadd.s32 %s121, 1
      %s123 = scalar_select %p120, %s121, %s122
      %p126 = pneg %p120
      %p127 = scmp.eq.s32.totalorder %s12, 1
      %p128 = por %p126, %p127
      %p129 = scmp.ne.s32.totalorder %s121, %s124
      %p130 = scmp.eq.s32.totalorder %s12, 0
      %p131 = por %p129, %p130
      %p132 = scmp.ne.s32.totalorder %s121, %s124
      %p133 = scmp.eq.s32.totalorder %s17, 1
      %p134 = por %p132, %p133
      %p135 = scmp.ne.s32.totalorder %s124, %s125
      %p136 = scmp.eq.s32.totalorder %s17, 0
      %p137 = por %p135, %p136
      %p138 = scmp.ne.s32.totalorder %s124, %s125
      %p139 = scmp.eq.s32.totalorder %s18, 1
      %p140 = por %p138, %p139
      %p142 = scmp.ne.s32.totalorder %s125, %s141
      %p143 = scmp.eq.s32.totalorder %s18, 0
      %p144 = por %p142, %p143
      %p145 = scmp.le.s32.totalorder 1, %s12
      %p146 = scmp.lt.s32.totalorder %s12, 3
      %p147 = pnand %p145, %p146
      %p148 = pneg %p147
      // Predicated region
      $region9: #{surface_loss.1} parent=5 // pred_check
        _
      $region10: #{surface_loss.1} parent=5 // pred_check_branch
        %150 = sbr.rel (%p147) target = $region12
      $region11: #{surface_loss.1} parent=5 // pred_region
        %s151 = ssub.s32 %s12, 1
        // Predicated region
        $region13: #{surface_loss.1} parent=11 // pred_check
          %p152 = pneg %p33
        $region14: #{surface_loss.1} parent=11 // pred_check_branch
          %154 = sbr.rel (%p152) target = $region16
        $region15: #{surface_loss.1} parent=11 // pred_region
          _
        $region16: #{surface_loss.1} parent=11 // pred_fallthru
          _
      $region12: #{surface_loss.1} parent=5 // pred_fallthru
        _
      %p155 = scmp.lt.s32.totalorder %s12, 2
      // Predicated region
      $region17: #{surface_loss.1} parent=5 // pred_check
        %p156 = pneg %p155
      $region18: #{surface_loss.1} parent=5 // pred_check_branch
        %158 = sbr.rel (%p156) target = $region20
      $region19: #{surface_loss.1} parent=5 // pred_region
        // Predicated region
        $region21: #{surface_loss.1} parent=19 // pred_check
          %p159 = pneg %p53
        $region22: #{surface_loss.1} parent=19 // pred_check_branch
          %161 = sbr.rel (%p159) target = $region24
        $region23: #{surface_loss.1} parent=19 // pred_region
          %s162 = sand.u32 %s43, 1
          %s163 = sand.u32 %s43, 1
          %s164 = smul.addr %s163, 64
          %s165 = scalar_lea.vmem [#allocation5], %s164
          %s166 = smul.u32 8, %s12
          %s167 = smul.addr %s166, 4
          %s168 = scalar_lea.vmem %s2, %s167
          // Predicated region
          $region25: #{surface_loss.1} parent=23 // pred_check
            _
          $region26: #{surface_loss.1} parent=23 // pred_check_branch
            %170 = sbr.rel (0) target = $region28
          $region27: #{surface_loss.1} parent=23 // pred_region
            // Predicated region
            $region29: #{surface_loss.1} parent=27 // pred_check
              _
            $region30: #{surface_loss.1} parent=27 // pred_check_branch
              %172 = sbr.rel (0) target = $region32
            $region31: #{surface_loss.1} parent=27 // pred_region
              loop: start=0, step=1, limit=1
              $region33: #{surface_loss.1} parent=31 // loop_pre_header
                _
              $region34: #{surface_loss.1} parent=31 // loop_header
                %s174 = sphi 0, %s178
                %p175 = scmp.ge.s32.totalorder %s174, 1
                %s179 = sphi %s168, %s168
                %s180 = sphi %s165, %s165
              $region35: #{surface_loss.1} parent=31 // loop_header_branch
                %177 = sbr.rel (%p175) target = $region39
              $region36: #{surface_loss.1} parent=31 // loop_body
                %v181 = vld [vmem:[%s179] sm:$0xff]
                %182 = vst [vmem:[%s180] sm:$0xff] %v181
                %v183 = vld [vmem:[%s179 + $0x8] sm:$0xff]
                %184 = vst [vmem:[%s180 + $0x8] sm:$0xff] %v183
                %v185 = vld [vmem:[%s179 + $0x10] sm:$0xff]
                %186 = vst [vmem:[%s180 + $0x10] sm:$0xff] %v185
                %v187 = vld [vmem:[%s179 + $0x18] sm:$0xff]
                %188 = vst [vmem:[%s180 + $0x18] sm:$0xff] %v187
                %v189 = vld [vmem:[%s179 + $0x40] sm:$0xff]
                %190 = vst [vmem:[%s180 + $0x20] sm:$0xff] %v189
                %v191 = vld [vmem:[%s179 + $0x48] sm:$0xff]
                %192 = vst [vmem:[%s180 + $0x28] sm:$0xff] %v191
                %v193 = vld [vmem:[%s179 + $0x50] sm:$0xff]
                %194 = vst [vmem:[%s180 + $0x30] sm:$0xff] %v193
                %v195 = vld [vmem:[%s179 + $0x58] sm:$0xff]
                %196 = vst [vmem:[%s180 + $0x38] sm:$0xff] %v195
              $region37: #{surface_loss.1} parent=31 // loop_footer
                %s178 = sadd.s32 1, %s174
              $region38: #{surface_loss.1} parent=31 // loop_footer_branch
                %173 = sbr.rel target = $region34
              $region39: #{surface_loss.1} parent=31 // loop_exit
                _
            $region32: #{surface_loss.1} parent=27 // pred_fallthru
              _
            // Predicated region
            $region40: #{surface_loss.1} parent=27 // pred_check
              _
            $region41: #{surface_loss.1} parent=27 // pred_check_branch
              %198 = sbr.rel target = $region43
            $region42: #{surface_loss.1} parent=27 // pred_region
              _
            $region43: #{surface_loss.1} parent=27 // pred_fallthru
              _
          $region28: #{surface_loss.1} parent=23 // pred_fallthru
            _
          %199 = vnop
        $region24: #{surface_loss.1} parent=19 // pred_fallthru
          _
        // Predicated region
        $region44: #{surface_loss.1} parent=19 // pred_check
          %p200 = pneg %p79
        $region45: #{surface_loss.1} parent=19 // pred_check_branch
          %202 = sbr.rel (%p200) target = $region47
        $region46: #{surface_loss.1} parent=19 // pred_region
          %s203 = smul.u32 8, %s12
          %p204 = scmp.lt.s32.totalorder %s203, 15
          %s205 = scalar_select %p204, %s203, 15
          %s206 = scalar_lea.vmem %s3, %s205
          %s207 = smul.u32 8, %s12
        $region47: #{surface_loss.1} parent=19 // pred_fallthru
          _
        // Predicated region
        $region48: #{surface_loss.1} parent=19 // pred_check
          %p208 = pneg %p105
        $region49: #{surface_loss.1} parent=19 // pred_check_branch
          %210 = sbr.rel (%p208) target = $region51
        $region50: #{surface_loss.1} parent=19 // pred_region
          %s211 = smul.u32 8, %s12
          %p212 = scmp.lt.s32.totalorder %s211, 15
          %s213 = scalar_select %p212, %s211, 15
          %s214 = scalar_lea.vmem %s4, %s213
          %s215 = smul.u32 8, %s12
        $region51: #{surface_loss.1} parent=19 // pred_fallthru
          _
      $region20: #{surface_loss.1} parent=5 // pred_fallthru
        _
      %p216 = scmp.le.s32.totalorder 1, %s12
      %p217 = scmp.lt.s32.totalorder %s12, 3
      %p218 = pnand %p216, %p217
      %p219 = pneg %p218
      // Predicated region
      $region52: #{surface_loss.1} parent=5 // pred_check
        _
      $region53: #{surface_loss.1} parent=5 // pred_check_branch
        %221 = sbr.rel (%p218) target = $region55
      $region54: #{surface_loss.1} parent=5 // pred_region
        %s222 = ssub.s32 %s12, 1
        %s223 = sand.u32 %s46, 1
        %s224 = sand.u32 %s46, 1
        %s225 = smul.addr %s224, 64
        %s226 = scalar_lea.vmem [#allocation5], %s225
        // Predicated region
        $region56: #{surface_loss.1} parent=54 // pred_check
          %p227 = pneg %p59
        $region57: #{surface_loss.1} parent=54 // pred_check_branch
          %229 = sbr.rel (%p227) target = $region59
        $region58: #{surface_loss.1} parent=54 // pred_region
          _
        $region59: #{surface_loss.1} parent=54 // pred_fallthru
          _
        %p230 = pneg %p33
        %p231 = pneg %p30
        %s232 = sand.u32 %s46, 1
        %s233 = sand.u32 %s46, 1
        %s234 = smul.addr %s233, 64
        %s235 = scalar_lea.vmem [#allocation5], %s234
        %p236 = pneg %p59
        %p237 = pneg %p56
        %s238 = smul.u32 8, %s17
        %p239 = scmp.lt.s32.totalorder %s238, 15
        %s240 = scalar_select %p239, %s238, 15
        %s241 = scalar_lea.vmem %s3, %s240
        %p242 = pneg %p85
        %p243 = pneg %p82
        %s244 = smul.u32 8, %s17
        %p245 = scmp.lt.s32.totalorder %s244, 15
        %s246 = scalar_select %p245, %s244, 15
        %s247 = scalar_lea.vmem %s4, %s246
        %p248 = pneg %p111
        %p249 = pneg %p108
        %p250 = pneg %p137
        %p251 = pneg %p134
        %p252 = scmp.lt.s32.totalorder %s17, 1
        %s253 = scalar_select %p252, %s17, 1
        %s254 = smul.addr %s253, 8
        %s255 = scalar_lea.vmem %s5, %s254
        %s256 = smul.u32 8, %s17
        %s257 = smul.u32 8, %s17
        %p258 = scmp.lt.s32.totalorder %s257, 15
        %s259 = scalar_select %p258, %s257, 15
        %s260 = scalar_lea.vmem %s3, %s259
        %s261 = smul.u32 8, %s17
        %s262 = smul.u32 8, %s17
        %p263 = scmp.lt.s32.totalorder %s262, 15
        %s264 = scalar_select %p263, %s262, 15
        %s265 = scalar_lea.vmem %s4, %s264
        %s266 = smul.u32 8, %s17
        %p267 = scmp.lt.s32.totalorder %s17, 1
        %s268 = scalar_select %p267, %s17, 1
        %s269 = smul.addr %s268, 8
        %s270 = scalar_lea.vmem %s5, %s269
        %272 = vst [vmem:[#allocation2] sm:$0xff] 1e+09
        %273 = vst [vmem:[#allocation2 + $0x8] sm:$0xff] 1e+09
        %274 = vst [vmem:[#allocation2 + $0x10] sm:$0xff] 1e+09
        %275 = vst [vmem:[#allocation2 + $0x18] sm:$0xff] 1e+09
        %276 = vst [vmem:[#allocation2 + $0x20] sm:$0xff] 1e+09
        %277 = vst [vmem:[#allocation2 + $0x28] sm:$0xff] 1e+09
        %278 = vst [vmem:[#allocation2 + $0x30] sm:$0xff] 1e+09
        %279 = vst [vmem:[#allocation2 + $0x38] sm:$0xff] 1e+09
        %v280 = vld [vmem:[%s226] sm:$0xff]
        %v281 = vld [vmem:[%s226 + $0x8] sm:$0xff]
        %v282 = vld [vmem:[%s226 + $0x10] sm:$0xff]
        %v283 = vld [vmem:[%s226 + $0x18] sm:$0xff]
        %v284 = vld [vmem:[%s226 + $0x20] sm:$0xff]
        %v285 = vld [vmem:[%s226 + $0x28] sm:$0xff]
        %v286 = vld [vmem:[%s226 + $0x30] sm:$0xff]
        %v287 = vld [vmem:[%s226 + $0x38] sm:$0xff]
        %s288 = sld [smem:[#allocation4]]
        // While loop
        $region60: #{surface_loss.1} parent=54 // loop_pre_header
          _
        $region61: #{surface_loss.1} parent=54 // loop_header
          %s290 = sphi 0, %s292
          %p291 = scmp.ge.s32.totalorder %s290, %s288
        $region62: #{surface_loss.1} parent=54 // loop_header_branch
          %294 = sbr.rel (%p291) target = $region66
        $region63: #{surface_loss.1} parent=54 // loop_body
          %s295 = smul.u32 %s290, 256
          %s296 = sshra.s32 %s295, 3
          %s297 = sand.u32 %s295, 7
          %s298 = smul.addr %s296, 4
          %s299 = scalar_lea.vmem %s1, %s298
          %v300 = vld [vmem:[%s299] sm:$0xf]
          %v301 = vld [vmem:[%s299 + $0x4] sm:$0xf]
          %v302 = vld [vmem:[%s299 + $0x8] sm:$0xf]
          %v303 = vld [vmem:[%s299 + $0xc] sm:$0xf]
          %v304 = vld [vmem:[%s299 + $0x10] sm:$0xf]
          %v305 = vld [vmem:[%s299 + $0x14] sm:$0xf]
          %v306 = vld [vmem:[%s299 + $0x18] sm:$0xf]
          %v307 = vld [vmem:[%s299 + $0x1c] sm:$0xf]
          %v308 = vld [vmem:[%s299 + $0x20] sm:$0xf]
          %v309 = vld [vmem:[%s299 + $0x24] sm:$0xf]
          %v310 = vld [vmem:[%s299 + $0x28] sm:$0xf]
          %v311 = vld [vmem:[%s299 + $0x2c] sm:$0xf]
          %v312 = vld [vmem:[%s299 + $0x30] sm:$0xf]
          %v313 = vld [vmem:[%s299 + $0x34] sm:$0xf]
          %v314 = vld [vmem:[%s299 + $0x38] sm:$0xf]
          %v315 = vld [vmem:[%s299 + $0x3c] sm:$0xf]
          %v316 = vld [vmem:[%s299 + $0x40] sm:$0xf]
          %v317 = vld [vmem:[%s299 + $0x44] sm:$0xf]
          %v318 = vld [vmem:[%s299 + $0x48] sm:$0xf]
          %v319 = vld [vmem:[%s299 + $0x4c] sm:$0xf]
          %v320 = vld [vmem:[%s299 + $0x50] sm:$0xf]
          %v321 = vld [vmem:[%s299 + $0x54] sm:$0xf]
          %v322 = vld [vmem:[%s299 + $0x58] sm:$0xf]
          %v323 = vld [vmem:[%s299 + $0x5c] sm:$0xf]
          %v324 = vld [vmem:[%s299 + $0x60] sm:$0xf]
          %v325 = vld [vmem:[%s299 + $0x64] sm:$0xf]
          %v326 = vld [vmem:[%s299 + $0x68] sm:$0xf]
          %v327 = vld [vmem:[%s299 + $0x6c] sm:$0xf]
          %v328 = vld [vmem:[%s299 + $0x70] sm:$0xf]
          %v329 = vld [vmem:[%s299 + $0x74] sm:$0xf]
          %v330 = vld [vmem:[%s299 + $0x78] sm:$0xf]
          %v331 = vld [vmem:[%s299 + $0x7c] sm:$0xf]
          %v364 = vunpack.c.l.b16 %v300
          %v365 = vunpack.c.l.b16 %v301
          %v366 = vunpack.c.l.b16 %v302
          %v367 = vunpack.c.l.b16 %v303
          %v368 = vunpack.c.l.b16 %v304
          %v369 = vunpack.c.l.b16 %v305
          %v370 = vunpack.c.l.b16 %v306
          %v371 = vunpack.c.l.b16 %v307
          %v372 = vunpack.c.l.b16 %v308
          %v373 = vunpack.c.l.b16 %v309
          %v374 = vunpack.c.l.b16 %v310
          %v375 = vunpack.c.l.b16 %v311
          %v376 = vunpack.c.l.b16 %v312
          %v377 = vunpack.c.l.b16 %v313
          %v378 = vunpack.c.l.b16 %v314
          %v379 = vunpack.c.l.b16 %v315
          %v380 = vunpack.c.l.b16 %v316
          %v381 = vunpack.c.l.b16 %v317
          %v382 = vunpack.c.l.b16 %v318
          %v383 = vunpack.c.l.b16 %v319
          %v384 = vunpack.c.l.b16 %v320
          %v385 = vunpack.c.l.b16 %v321
          %v386 = vunpack.c.l.b16 %v322
          %v387 = vunpack.c.l.b16 %v323
          %v388 = vunpack.c.l.b16 %v324
          %v389 = vunpack.c.l.b16 %v325
          %v390 = vunpack.c.l.b16 %v326
          %v391 = vunpack.c.l.b16 %v327
          %v392 = vunpack.c.l.b16 %v328
          %v393 = vunpack.c.l.b16 %v329
          %v394 = vunpack.c.l.b16 %v330
          %v395 = vunpack.c.l.b16 %v331
          %v396 = vpack.c.b16 %v365, %v364
          %v397 = vpack.c.b16 %v367, %v366
          %v398 = vpack.c.b16 %v369, %v368
          %v399 = vpack.c.b16 %v371, %v370
          %v400 = vpack.c.b16 %v373, %v372
          %v401 = vpack.c.b16 %v375, %v374
          %v402 = vpack.c.b16 %v377, %v376
          %v403 = vpack.c.b16 %v379, %v378
          %v404 = vpack.c.b16 %v381, %v380
          %v405 = vpack.c.b16 %v383, %v382
          %v406 = vpack.c.b16 %v385, %v384
          %v407 = vpack.c.b16 %v387, %v386
          %v408 = vpack.c.b16 %v389, %v388
          %v409 = vpack.c.b16 %v391, %v390
          %v410 = vpack.c.b16 %v393, %v392
          %v411 = vpack.c.b16 %v395, %v394
          %v420 = vunpack.c.l.b16 %v280
          %v421 = vunpack.c.h.b16 %v280
          %v422 = vunpack.c.l.b16 %v281
          %v423 = vunpack.c.h.b16 %v281
          %v424 = vunpack.c.l.b16 %v282
          %v425 = vunpack.c.h.b16 %v282
          %v426 = vunpack.c.l.b16 %v283
          %v427 = vunpack.c.h.b16 %v283
          %v428 = vunpack.c.l.b16 %v284
          %v429 = vunpack.c.h.b16 %v284
          %v430 = vunpack.c.l.b16 %v285
          %v431 = vunpack.c.h.b16 %v285
          %v432 = vunpack.c.l.b16 %v286
          %v433 = vunpack.c.h.b16 %v286
          %v434 = vunpack.c.l.b16 %v287
          %v435 = vunpack.c.h.b16 %v287
          %v436 = vpack.c.b16 %v428, %v420
          %v437 = vpack.c.b16 %v429, %v421
          %v438 = vpack.c.b16 %v430, %v422
          %v439 = vpack.c.b16 %v431, %v423
          %v440 = vpack.c.b16 %v432, %v424
          %v441 = vpack.c.b16 %v433, %v425
          %v442 = vpack.c.b16 %v434, %v426
          %v443 = vpack.c.b16 %v435, %v427
          %vm452 = vcmask 130048
          %v454 = vsel %vm452, %v396, 0
          %v457 = vsel %vm452, %v397, 0
          %v460 = vsel %vm452, %v398, 0
          %v463 = vsel %vm452, %v399, 0
          %v466 = vsel %vm452, %v400, 0
          %v469 = vsel %vm452, %v401, 0
          %v472 = vsel %vm452, %v402, 0
          %v475 = vsel %vm452, %v403, 0
          %v478 = vsel %vm452, %v404, 0
          %v481 = vsel %vm452, %v405, 0
          %v484 = vsel %vm452, %v406, 0
          %v487 = vsel %vm452, %v407, 0
          %v490 = vsel %vm452, %v408, 0
          %v493 = vsel %vm452, %v409, 0
          %v496 = vsel %vm452, %v410, 0
          %v499 = vsel %vm452, %v411, 0
          %501 = vmatprep.subr.bf16.mxu0 %v437
          %502 = vmatpush1.bf16.msra.mxu0 %v436
          %503 = vmatprep.subr.bf16.mxu0 0
          %504 = vmatpush1.bf16.msra.mxu0 0
          %505 = vmatprep.subr.bf16.mxu0 0
          %506 = vmatpush1.bf16.msra.mxu0 0
          %507 = vmatprep.subr.bf16.mxu0 0
          %508 = vmatpush1.bf16.msra.mxu0 0
          %509 = vmatprep.subr.bf16.mxu0 0
          %510 = vmatpush1.bf16.msra.mxu0 0
          %511 = vmatprep.subr.bf16.mxu0 0
          %512 = vmatpush1.bf16.msra.mxu0 0
          %513 = vmatprep.subr.bf16.mxu0 0
          %514 = vmatpush1.bf16.msra.mxu0 0
          %515 = vmatprep.subr.bf16.mxu0 0
          %516 = vmatpush1.bf16.msra.mxu0 0
          %517 = vmatprep.subr.bf16.mxu0 0
          %518 = vmatpush1.bf16.msra.mxu0 0
          %519 = vmatprep.subr.bf16.mxu0 0
          %520 = vmatpush1.bf16.msra.mxu0 0
          %521 = vmatprep.subr.bf16.mxu0 0
          %522 = vmatpush1.bf16.msra.mxu0 0
          %523 = vmatprep.subr.bf16.mxu0 0
          %524 = vmatpush1.bf16.msra.mxu0 0
          %525 = vmatprep.subr.bf16.mxu0 0
          %526 = vmatpush1.bf16.msra.mxu0 0
          %527 = vmatprep.subr.bf16.mxu0 0
          %528 = vmatpush1.bf16.msra.mxu0 0
          %529 = vmatprep.subr.bf16.mxu0 0
          %530 = vmatpush1.bf16.msra.mxu0 0
          %531 = vmatprep.subr.bf16.mxu0 0
          %532 = vmatpush1.bf16.msra.mxu0 0
          %533 = vmatprep.mubr.bf16.mxu0 0
          %534 = vmatmul.mubr.bf16.gmra.mrb[0].mxu0 %v454
          %v535 = vpop.f32.mrb[0].mxu0
          %v536 = vadd.f32 0.0, %v535
          %v537 = vpop.f32.mrb[0].mxu0
          %v538 = vadd.f32 0.0, %v537
          %v539 = vpop.f32.mrb[0].mxu0
          %v540 = vadd.f32 0.0, %v539
          %v541 = vpop.f32.mrb[0].mxu0
          %v542 = vadd.f32 0.0, %v541
          %543 = vmatprep.mubr.bf16.mxu0 0
          %544 = vmatmul.mubr.bf16.gmra.mrb[0].mxu0 %v457
          %v545 = vpop.f32.mrb[0].mxu0
          %v546 = vadd.f32 0.0, %v545
          %v547 = vpop.f32.mrb[0].mxu0
          %v548 = vadd.f32 0.0, %v547
          %v549 = vpop.f32.mrb[0].mxu0
          %v550 = vadd.f32 0.0, %v549
          %v551 = vpop.f32.mrb[0].mxu0
          %v552 = vadd.f32 0.0, %v551
          %553 = vmatprep.mubr.bf16.mxu0 0
          %554 = vmatmul.mubr.bf16.gmra.mrb[0].mxu0 %v460
          %v555 = vpop.f32.mrb[0].mxu0
          %v556 = vadd.f32 0.0, %v555
          %v557 = vpop.f32.mrb[0].mxu0
          %v558 = vadd.f32 0.0, %v557
          %v559 = vpop.f32.mrb[0].mxu0
          %v560 = vadd.f32 0.0, %v559
          %v561 = vpop.f32.mrb[0].mxu0
          %v562 = vadd.f32 0.0, %v561
          %563 = vmatprep.mubr.bf16.mxu0 0
          %564 = vmatmul.mubr.bf16.gmra.mrb[0].mxu0 %v463
          %v565 = vpop.f32.mrb[0].mxu0
          %v566 = vadd.f32 0.0, %v565
          %v567 = vpop.f32.mrb[0].mxu0
          %v568 = vadd.f32 0.0, %v567
          %v569 = vpop.f32.mrb[0].mxu0
          %v570 = vadd.f32 0.0, %v569
          %v571 = vpop.f32.mrb[0].mxu0
          %v572 = vadd.f32 0.0, %v571
          %573 = vmatprep.mubr.bf16.mxu0 0
          %574 = vmatmul.mubr.bf16.gmra.mrb[0].mxu0 %v466
          %v575 = vpop.f32.mrb[0].mxu0
          %v576 = vadd.f32 0.0, %v575
          %v577 = vpop.f32.mrb[0].mxu0
          %v578 = vadd.f32 0.0, %v577
          %v579 = vpop.f32.mrb[0].mxu0
          %v580 = vadd.f32 0.0, %v579
          %v581 = vpop.f32.mrb[0].mxu0
          %v582 = vadd.f32 0.0, %v581
          %583 = vmatprep.mubr.bf16.mxu0 0
          %584 = vmatmul.mubr.bf16.gmra.mrb[0].mxu0 %v469
          %v585 = vpop.f32.mrb[0].mxu0
          %v586 = vadd.f32 0.0, %v585
          %v587 = vpop.f32.mrb[0].mxu0
          %v588 = vadd.f32 0.0, %v587
          %v589 = vpop.f32.mrb[0].mxu0
          %v590 = vadd.f32 0.0, %v589
          %v591 = vpop.f32.mrb[0].mxu0
          %v592 = vadd.f32 0.0, %v591
          %593 = vmatprep.mubr.bf16.mxu0 0
          %594 = vmatmul.mubr.bf16.gmra.mrb[0].mxu0 %v472
          %v595 = vpop.f32.mrb[0].mxu0
          %v596 = vadd.f32 0.0, %v595
          %v597 = vpop.f32.mrb[0].mxu0
          %v598 = vadd.f32 0.0, %v597
          %v599 = vpop.f32.mrb[0].mxu0
          %v600 = vadd.f32 0.0, %v599
          %v601 = vpop.f32.mrb[0].mxu0
          %v602 = vadd.f32 0.0, %v601
          %603 = vmatprep.mubr.bf16.mxu0 0
          %604 = vmatmul.mubr.bf16.gmra.mrb[0].mxu0 %v475
          %v605 = vpop.f32.mrb[0].mxu0
          %v606 = vadd.f32 0.0, %v605
          %v607 = vpop.f32.mrb[0].mxu0
          %v608 = vadd.f32 0.0, %v607
          %v609 = vpop.f32.mrb[0].mxu0
          %v610 = vadd.f32 0.0, %v609
          %v611 = vpop.f32.mrb[0].mxu0
          %v612 = vadd.f32 0.0, %v611
          %613 = vmatprep.mubr.bf16.mxu0 0
          %614 = vmatmul.mubr.bf16.gmra.mrb[0].mxu0 %v478
          %v615 = vpop.f32.mrb[0].mxu0
          %v616 = vadd.f32 0.0, %v615
          %v617 = vpop.f32.mrb[0].mxu0
          %v618 = vadd.f32 0.0, %v617
          %v619 = vpop.f32.mrb[0].mxu0
          %v620 = vadd.f32 0.0, %v619
          %v621 = vpop.f32.mrb[0].mxu0
          %v622 = vadd.f32 0.0, %v621
          %623 = vmatprep.mubr.bf16.mxu0 0
          %624 = vmatmul.mubr.bf16.gmra.mrb[0].mxu0 %v481
          %v625 = vpop.f32.mrb[0].mxu0
          %v626 = vadd.f32 0.0, %v625
          %v627 = vpop.f32.mrb[0].mxu0
          %v628 = vadd.f32 0.0, %v627
          %v629 = vpop.f32.mrb[0].mxu0
          %v630 = vadd.f32 0.0, %v629
          %v631 = vpop.f32.mrb[0].mxu0
          %v632 = vadd.f32 0.0, %v631
          %633 = vmatprep.mubr.bf16.mxu0 0
          %634 = vmatmul.mubr.bf16.gmra.mrb[0].mxu0 %v484
          %v635 = vpop.f32.mrb[0].mxu0
          %v636 = vadd.f32 0.0, %v635
          %v637 = vpop.f32.mrb[0].mxu0
          %v638 = vadd.f32 0.0, %v637
          %v639 = vpop.f32.mrb[0].mxu0
          %v640 = vadd.f32 0.0, %v639
          %v641 = vpop.f32.mrb[0].mxu0
          %v642 = vadd.f32 0.0, %v641
          %643 = vmatprep.mubr.bf16.mxu0 0
          %644 = vmatmul.mubr.bf16.gmra.mrb[0].mxu0 %v487
          %v645 = vpop.f32.mrb[0].mxu0
          %v646 = vadd.f32 0.0, %v645
          %v647 = vpop.f32.mrb[0].mxu0
          %v648 = vadd.f32 0.0, %v647
          %v649 = vpop.f32.mrb[0].mxu0
          %v650 = vadd.f32 0.0, %v649
          %v651 = vpop.f32.mrb[0].mxu0
          %v652 = vadd.f32 0.0, %v651
          %653 = vmatprep.mubr.bf16.mxu0 0
          %654 = vmatmul.mubr.bf16.gmra.mrb[0].mxu0 %v490
          %v655 = vpop.f32.mrb[0].mxu0
          %v656 = vadd.f32 0.0, %v655
          %v657 = vpop.f32.mrb[0].mxu0
          %v658 = vadd.f32 0.0, %v657
          %v659 = vpop.f32.mrb[0].mxu0
          %v660 = vadd.f32 0.0, %v659
          %v661 = vpop.f32.mrb[0].mxu0
          %v662 = vadd.f32 0.0, %v661
          %663 = vmatprep.mubr.bf16.mxu0 0
          %664 = vmatmul.mubr.bf16.gmra.mrb[0].mxu0 %v493
          %v665 = vpop.f32.mrb[0].mxu0
          %v666 = vadd.f32 0.0, %v665
          %v667 = vpop.f32.mrb[0].mxu0
          %v668 = vadd.f32 0.0, %v667
          %v669 = vpop.f32.mrb[0].mxu0
          %v670 = vadd.f32 0.0, %v669
          %v671 = vpop.f32.mrb[0].mxu0
          %v672 = vadd.f32 0.0, %v671
          %673 = vmatprep.mubr.bf16.mxu0 0
          %674 = vmatmul.mubr.bf16.gmra.mrb[0].mxu0 %v496
          %v675 = vpop.f32.mrb[0].mxu0
          %v676 = vadd.f32 0.0, %v675
          %v677 = vpop.f32.mrb[0].mxu0
          %v678 = vadd.f32 0.0, %v677
          %v679 = vpop.f32.mrb[0].mxu0
          %v680 = vadd.f32 0.0, %v679
          %v681 = vpop.f32.mrb[0].mxu0
          %v682 = vadd.f32 0.0, %v681
          %683 = vmatprep.mubr.bf16.mxu0 0
          %684 = vmatmul.mubr.bf16.gmra.mrb[0].mxu0 %v499
          %v685 = vpop.f32.mrb[0].mxu0
          %v686 = vadd.f32 0.0, %v685
          %v687 = vpop.f32.mrb[0].mxu0
          %v688 = vadd.f32 0.0, %v687
          %v689 = vpop.f32.mrb[0].mxu0
          %v690 = vadd.f32 0.0, %v689
          %v691 = vpop.f32.mrb[0].mxu0
          %v692 = vadd.f32 0.0, %v691
          %693 = vdwg.mxu0
          %694 = vmatprep.subr.bf16.mxu0 %v439
          %695 = vmatpush1.bf16.msra.mxu0 %v438
          %696 = vmatprep.subr.bf16.mxu0 0
          %697 = vmatpush1.bf16.msra.mxu0 0
          %698 = vmatprep.subr.bf16.mxu0 0
          %699 = vmatpush1.bf16.msra.mxu0 0
          %700 = vmatprep.subr.bf16.mxu0 0
          %701 = vmatpush1.bf16.msra.mxu0 0
          %702 = vmatprep.subr.bf16.mxu0 0
          %703 = vmatpush1.bf16.msra.mxu0 0
          %704 = vmatprep.subr.bf16.mxu0 0
          %705 = vmatpush1.bf16.msra.mxu0 0
          %706 = vmatprep.subr.bf16.mxu0 0
          %707 = vmatpush1.bf16.msra.mxu0 0
          %708 = vmatprep.subr.bf16.mxu0 0
          %709 = vmatpush1.bf16.msra.mxu0 0
          %710 = vmatprep.subr.bf16.mxu0 0
          %711 = vmatpush1.bf16.msra.mxu0 0
          %712 = vmatprep.subr.bf16.mxu0 0
          %713 = vmatpush1.bf16.msra.mxu0 0
          %714 = vmatprep.subr.bf16.mxu0 0
          %715 = vmatpush1.bf16.msra.mxu0 0
          %716 = vmatprep.subr.bf16.mxu0 0
          %717 = vmatpush1.bf16.msra.mxu0 0
          %718 = vmatprep.subr.bf16.mxu0 0
          %719 = vmatpush1.bf16.msra.mxu0 0
          %720 = vmatprep.subr.bf16.mxu0 0
          %721 = vmatpush1.bf16.msra.mxu0 0
          %722 = vmatprep.subr.bf16.mxu0 0
          %723 = vmatpush1.bf16.msra.mxu0 0
          %724 = vmatprep.subr.bf16.mxu0 0
          %725 = vmatpush1.bf16.msra.mxu0 0
          %726 = vmatprep.mubr.bf16.mxu0 0
          %727 = vmatmul.mubr.bf16.gmra.mrb[0].mxu0 %v454
          %v728 = vpop.f32.mrb[0].mxu0
          %v729 = vadd.f32 0.0, %v728
          %v730 = vpop.f32.mrb[0].mxu0
          %v731 = vadd.f32 0.0, %v730
          %v732 = vpop.f32.mrb[0].mxu0
          %v733 = vadd.f32 0.0, %v732
          %v734 = vpop.f32.mrb[0].mxu0
          %v735 = vadd.f32 0.0, %v734
          %736 = vmatprep.mubr.bf16.mxu0 0
          %737 = vmatmul.mubr.bf16.gmra.mrb[0].mxu0 %v457
          %v738 = vpop.f32.mrb[0].mxu0
          %v739 = vadd.f32 0.0, %v738
          %v740 = vpop.f32.mrb[0].mxu0
          %v741 = vadd.f32 0.0, %v740
          %v742 = vpop.f32.mrb[0].mxu0
          %v743 = vadd.f32 0.0, %v742
          %v744 = vpop.f32.mrb[0].mxu0
          %v745 = vadd.f32 0.0, %v744
          %746 = vmatprep.mubr.bf16.mxu0 0
          %747 = vmatmul.mubr.bf16.gmra.mrb[0].mxu0 %v460
          %v748 = vpop.f32.mrb[0].mxu0
          %v749 = vadd.f32 0.0, %v748
          %v750 = vpop.f32.mrb[0].mxu0
          %v751 = vadd.f32 0.0, %v750
          %v752 = vpop.f32.mrb[0].mxu0
          %v753 = vadd.f32 0.0, %v752
          %v754 = vpop.f32.mrb[0].mxu0
          %v755 = vadd.f32 0.0, %v754
          %756 = vmatprep.mubr.bf16.mxu0 0
          %757 = vmatmul.mubr.bf16.gmra.mrb[0].mxu0 %v463
          %v758 = vpop.f32.mrb[0].mxu0
          %v759 = vadd.f32 0.0, %v758
          %v760 = vpop.f32.mrb[0].mxu0
          %v761 = vadd.f32 0.0, %v760
          %v762 = vpop.f32.mrb[0].mxu0
          %v763 = vadd.f32 0.0, %v762
          %v764 = vpop.f32.mrb[0].mxu0
          %v765 = vadd.f32 0.0, %v764
          %766 = vmatprep.mubr.bf16.mxu0 0
          %767 = vmatmul.mubr.bf16.gmra.mrb[0].mxu0 %v466
          %v768 = vpop.f32.mrb[0].mxu0
          %v769 = vadd.f32 0.0, %v768
          %v770 = vpop.f32.mrb[0].mxu0
          %v771 = vadd.f32 0.0, %v770
          %v772 = vpop.f32.mrb[0].mxu0
          %v773 = vadd.f32 0.0, %v772
          %v774 = vpop.f32.mrb[0].mxu0
          %v775 = vadd.f32 0.0, %v774
          %776 = vmatprep.mubr.bf16.mxu0 0
          %777 = vmatmul.mubr.bf16.gmra.mrb[0].mxu0 %v469
          %v778 = vpop.f32.mrb[0].mxu0
          %v779 = vadd.f32 0.0, %v778
          %v780 = vpop.f32.mrb[0].mxu0
          %v781 = vadd.f32 0.0, %v780
          %v782 = vpop.f32.mrb[0].mxu0
          %v783 = vadd.f32 0.0, %v782
          %v784 = vpop.f32.mrb[0].mxu0
          %v785 = vadd.f32 0.0, %v784
          %786 = vmatprep.mubr.bf16.mxu0 0
          %787 = vmatmul.mubr.bf16.gmra.mrb[0].mxu0 %v472
          %v788 = vpop.f32.mrb[0].mxu0
          %v789 = vadd.f32 0.0, %v788
          %v790 = vpop.f32.mrb[0].mxu0
          %v791 = vadd.f32 0.0, %v790
          %v792 = vpop.f32.mrb[0].mxu0
          %v793 = vadd.f32 0.0, %v792
          %v794 = vpop.f32.mrb[0].mxu0
          %v795 = vadd.f32 0.0, %v794
          %796 = vmatprep.mubr.bf16.mxu0 0
          %797 = vmatmul.mubr.bf16.gmra.mrb[0].mxu0 %v475
          %v798 = vpop.f32.mrb[0].mxu0
          %v799 = vadd.f32 0.0, %v798
          %v800 = vpop.f32.mrb[0].mxu0
          %v801 = vadd.f32 0.0, %v800
          %v802 = vpop.f32.mrb[0].mxu0
          %v803 = vadd.f32 0.0, %v802
          %v804 = vpop.f32.mrb[0].mxu0
          %v805 = vadd.f32 0.0, %v804
          %806 = vmatprep.mubr.bf16.mxu0 0
          %807 = vmatmul.mubr.bf16.gmra.mrb[0].mxu0 %v478
          %v808 = vpop.f32.mrb[0].mxu0
          %v809 = vadd.f32 0.0, %v808
          %v810 = vpop.f32.mrb[0].mxu0
          %v811 = vadd.f32 0.0, %v810
          %v812 = vpop.f32.mrb[0].mxu0
          %v813 = vadd.f32 0.0, %v812
          %v814 = vpop.f32.mrb[0].mxu0
          %v815 = vadd.f32 0.0, %v814
          %816 = vmatprep.mubr.bf16.mxu0 0
          %817 = vmatmul.mubr.bf16.gmra.mrb[0].mxu0 %v481
          %v818 = vpop.f32.mrb[0].mxu0
          %v819 = vadd.f32 0.0, %v818
          %v820 = vpop.f32.mrb[0].mxu0
          %v821 = vadd.f32 0.0, %v820
          %v822 = vpop.f32.mrb[0].mxu0
          %v823 = vadd.f32 0.0, %v822
          %v824 = vpop.f32.mrb[0].mxu0
          %v825 = vadd.f32 0.0, %v824
          %826 = vmatprep.mubr.bf16.mxu0 0
          %827 = vmatmul.mubr.bf16.gmra.mrb[0].mxu0 %v484
          %v828 = vpop.f32.mrb[0].mxu0
          %v829 = vadd.f32 0.0, %v828
          %v830 = vpop.f32.mrb[0].mxu0
          %v831 = vadd.f32 0.0, %v830
          %v832 = vpop.f32.mrb[0].mxu0
          %v833 = vadd.f32 0.0, %v832
          %v834 = vpop.f32.mrb[0].mxu0
          %v835 = vadd.f32 0.0, %v834
          %836 = vmatprep.mubr.bf16.mxu0 0
          %837 = vmatmul.mubr.bf16.gmra.mrb[0].mxu0 %v487
          %v838 = vpop.f32.mrb[0].mxu0
          %v839 = vadd.f32 0.0, %v838
          %v840 = vpop.f32.mrb[0].mxu0
          %v841 = vadd.f32 0.0, %v840
          %v842 = vpop.f32.mrb[0].mxu0
          %v843 = vadd.f32 0.0, %v842
          %v844 = vpop.f32.mrb[0].mxu0
          %v845 = vadd.f32 0.0, %v844
          %846 = vmatprep.mubr.bf16.mxu0 0
          %847 = vmatmul.mubr.bf16.gmra.mrb[0].mxu0 %v490
          %v848 = vpop.f32.mrb[0].mxu0
          %v849 = vadd.f32 0.0, %v848
          %v850 = vpop.f32.mrb[0].mxu0
          %v851 = vadd.f32 0.0, %v850
          %v852 = vpop.f32.mrb[0].mxu0
          %v853 = vadd.f32 0.0, %v852
          %v854 = vpop.f32.mrb[0].mxu0
          %v855 = vadd.f32 0.0, %v854
          %856 = vmatprep.mubr.bf16.mxu0 0
          %857 = vmatmul.mubr.bf16.gmra.mrb[0].mxu0 %v493
          %v858 = vpop.f32.mrb[0].mxu0
          %v859 = vadd.f32 0.0, %v858
          %v860 = vpop.f32.mrb[0].mxu0
          %v861 = vadd.f32 0.0, %v860
          %v862 = vpop.f32.mrb[0].mxu0
          %v863 = vadd.f32 0.0, %v862
          %v864 = vpop.f32.mrb[0].mxu0
          %v865 = vadd.f32 0.0, %v864
          %866 = vmatprep.mubr.bf16.mxu0 0
          %867 = vmatmul.mubr.bf16.gmra.mrb[0].mxu0 %v496
          %v868 = vpop.f32.mrb[0].mxu0
          %v869 = vadd.f32 0.0, %v868
          %v870 = vpop.f32.mrb[0].mxu0
          %v871 = vadd.f32 0.0, %v870
          %v872 = vpop.f32.mrb[0].mxu0
          %v873 = vadd.f32 0.0, %v872
          %v874 = vpop.f32.mrb[0].mxu0
          %v875 = vadd.f32 0.0, %v874
          %876 = vmatprep.mubr.bf16.mxu0 0
          %877 = vmatmul.mubr.bf16.gmra.mrb[0].mxu0 %v499
          %v878 = vpop.f32.mrb[0].mxu0
          %v879 = vadd.f32 0.0, %v878
          %v880 = vpop.f32.mrb[0].mxu0
          %v881 = vadd.f32 0.0, %v880
          %v882 = vpop.f32.mrb[0].mxu0
          %v883 = vadd.f32 0.0, %v882
          %v884 = vpop.f32.mrb[0].mxu0
          %v885 = vadd.f32 0.0, %v884
          %886 = vdwg.mxu0
          %887 = vmatprep.subr.bf16.mxu0 %v441
          %888 = vmatpush1.bf16.msra.mxu0 %v440
          %889 = vmatprep.subr.bf16.mxu0 0
          %890 = vmatpush1.bf16.msra.mxu0 0
          %891 = vmatprep.subr.bf16.mxu0 0
          %892 = vmatpush1.bf16.msra.mxu0 0
          %893 = vmatprep.subr.bf16.mxu0 0
          %894 = vmatpush1.bf16.msra.mxu0 0
          %895 = vmatprep.subr.bf16.mxu0 0
          %896 = vmatpush1.bf16.msra.mxu0 0
          %897 = vmatprep.subr.bf16.mxu0 0
          %898 = vmatpush1.bf16.msra.mxu0 0
          %899 = vmatprep.subr.bf16.mxu0 0
          %900 = vmatpush1.bf16.msra.mxu0 0
          %901 = vmatprep.subr.bf16.mxu0 0
          %902 = vmatpush1.bf16.msra.mxu0 0
          %903 = vmatprep.subr.bf16.mxu0 0
          %904 = vmatpush1.bf16.msra.mxu0 0
          %905 = vmatprep.subr.bf16.mxu0 0
          %906 = vmatpush1.bf16.msra.mxu0 0
          %907 = vmatprep.subr.bf16.mxu0 0
          %908 = vmatpush1.bf16.msra.mxu0 0
          %909 = vmatprep.subr.bf16.mxu0 0
          %910 = vmatpush1.bf16.msra.mxu0 0
          %911 = vmatprep.subr.bf16.mxu0 0
          %912 = vmatpush1.bf16.msra.mxu0 0
          %913 = vmatprep.subr.bf16.mxu0 0
          %914 = vmatpush1.bf16.msra.mxu0 0
          %915 = vmatprep.subr.bf16.mxu0 0
          %916 = vmatpush1.bf16.msra.mxu0 0
          %917 = vmatprep.subr.bf16.mxu0 0
          %918 = vmatpush1.bf16.msra.mxu0 0
          %919 = vmatprep.mubr.bf16.mxu0 0
          %920 = vmatmul.mubr.bf16.gmra.mrb[0].mxu0 %v454
          %v921 = vpop.f32.mrb[0].mxu0
          %v922 = vadd.f32 0.0, %v921
          %v923 = vpop.f32.mrb[0].mxu0
          %v924 = vadd.f32 0.0, %v923
          %v925 = vpop.f32.mrb[0].mxu0
          %v926 = vadd.f32 0.0, %v925
          %v927 = vpop.f32.mrb[0].mxu0
          %v928 = vadd.f32 0.0, %v927
          %929 = vmatprep.mubr.bf16.mxu0 0
          %930 = vmatmul.mubr.bf16.gmra.mrb[0].mxu0 %v457
          %v931 = vpop.f32.mrb[0].mxu0
          %v932 = vadd.f32 0.0, %v931
          %v933 = vpop.f32.mrb[0].mxu0
          %v934 = vadd.f32 0.0, %v933
          %v935 = vpop.f32.mrb[0].mxu0
          %v936 = vadd.f32 0.0, %v935
          %v937 = vpop.f32.mrb[0].mxu0
          %v938 = vadd.f32 0.0, %v937
          %939 = vmatprep.mubr.bf16.mxu0 0
          %940 = vmatmul.mubr.bf16.gmra.mrb[0].mxu0 %v460
          %v941 = vpop.f32.mrb[0].mxu0
          %v942 = vadd.f32 0.0, %v941
          %v943 = vpop.f32.mrb[0].mxu0
          %v944 = vadd.f32 0.0, %v943
          %v945 = vpop.f32.mrb[0].mxu0
          %v946 = vadd.f32 0.0, %v945
          %v947 = vpop.f32.mrb[0].mxu0
          %v948 = vadd.f32 0.0, %v947
          %949 = vmatprep.mubr.bf16.mxu0 0
          %950 = vmatmul.mubr.bf16.gmra.mrb[0].mxu0 %v463
          %v951 = vpop.f32.mrb[0].mxu0
          %v952 = vadd.f32 0.0, %v951
          %v953 = vpop.f32.mrb[0].mxu0
          %v954 = vadd.f32 0.0, %v953
          %v955 = vpop.f32.mrb[0].mxu0
          %v956 = vadd.f32 0.0, %v955
          %v957 = vpop.f32.mrb[0].mxu0
          %v958 = vadd.f32 0.0, %v957
          %959 = vmatprep.mubr.bf16.mxu0 0
          %960 = vmatmul.mubr.bf16.gmra.mrb[0].mxu0 %v466
          %v961 = vpop.f32.mrb[0].mxu0
          %v962 = vadd.f32 0.0, %v961
          %v963 = vpop.f32.mrb[0].mxu0
          %v964 = vadd.f32 0.0, %v963
          %v965 = vpop.f32.mrb[0].mxu0
          %v966 = vadd.f32 0.0, %v965
          %v967 = vpop.f32.mrb[0].mxu0
          %v968 = vadd.f32 0.0, %v967
          %969 = vmatprep.mubr.bf16.mxu0 0
          %970 = vmatmul.mubr.bf16.gmra.mrb[0].mxu0 %v469
          %v971 = vpop.f32.mrb[0].mxu0
          %v972 = vadd.f32 0.0, %v971
          %v973 = vpop.f32.mrb[0].mxu0
          %v974 = vadd.f32 0.0, %v973
          %v975 = vpop.f32.mrb[0].mxu0
          %v976 = vadd.f32 0.0, %v975
          %v977 = vpop.f32.mrb[0].mxu0
          %v978 = vadd.f32 0.0, %v977
          %979 = vmatprep.mubr.bf16.mxu0 0
          %980 = vmatmul.mubr.bf16.gmra.mrb[0].mxu0 %v472
          %v981 = vpop.f32.mrb[0].mxu0
          %v982 = vadd.f32 0.0, %v981
          %v983 = vpop.f32.mrb[0].mxu0
          %v984 = vadd.f32 0.0, %v983
          %v985 = vpop.f32.mrb[0].mxu0
          %v986 = vadd.f32 0.0, %v985
          %v987 = vpop.f32.mrb[0].mxu0
          %v988 = vadd.f32 0.0, %v987
          %989 = vmatprep.mubr.bf16.mxu0 0
          %990 = vmatmul.mubr.bf16.gmra.mrb[0].mxu0 %v475
          %v991 = vpop.f32.mrb[0].mxu0
          %v992 = vadd.f32 0.0, %v991
          %v993 = vpop.f32.mrb[0].mxu0
          %v994 = vadd.f32 0.0, %v993
          %v995 = vpop.f32.mrb[0].mxu0
          %v996 = vadd.f32 0.0, %v995
          %v997 = vpop.f32.mrb[0].mxu0
          %v998 = vadd.f32 0.0, %v997
          %999 = vmatprep.mubr.bf16.mxu0 0
          %1000 = vmatmul.mubr.bf16.gmra.mrb[0].mxu0 %v478
          %v1001 = vpop.f32.mrb[0].mxu0
          %v1002 = vadd.f32 0.0, %v1001
          %v1003 = vpop.f32.mrb[0].mxu0
          %v1004 = vadd.f32 0.0, %v1003
          %v1005 = vpop.f32.mrb[0].mxu0
          %v1006 = vadd.f32 0.0, %v1005
          %v1007 = vpop.f32.mrb[0].mxu0
          %v1008 = vadd.f32 0.0, %v1007
          %1009 = vmatprep.mubr.bf16.mxu0 0
          %1010 = vmatmul.mubr.bf16.gmra.mrb[0].mxu0 %v481
          %v1011 = vpop.f32.mrb[0].mxu0
          %v1012 = vadd.f32 0.0, %v1011
          %v1013 = vpop.f32.mrb[0].mxu0
          %v1014 = vadd.f32 0.0, %v1013
          %v1015 = vpop.f32.mrb[0].mxu0
          %v1016 = vadd.f32 0.0, %v1015
          %v1017 = vpop.f32.mrb[0].mxu0
          %v1018 = vadd.f32 0.0, %v1017
          %1019 = vmatprep.mubr.bf16.mxu0 0
          %1020 = vmatmul.mubr.bf16.gmra.mrb[0].mxu0 %v484
          %v1021 = vpop.f32.mrb[0].mxu0
          %v1022 = vadd.f32 0.0, %v1021
          %v1023 = vpop.f32.mrb[0].mxu0
          %v1024 = vadd.f32 0.0, %v1023
          %v1025 = vpop.f32.mrb[0].mxu0
          %v1026 = vadd.f32 0.0, %v1025
          %v1027 = vpop.f32.mrb[0].mxu0
          %v1028 = vadd.f32 0.0, %v1027
          %1029 = vmatprep.mubr.bf16.mxu0 0
          %1030 = vmatmul.mubr.bf16.gmra.mrb[0].mxu0 %v487
          %v1031 = vpop.f32.mrb[0].mxu0
          %v1032 = vadd.f32 0.0, %v1031
          %v1033 = vpop.f32.mrb[0].mxu0
          %v1034 = vadd.f32 0.0, %v1033
          %v1035 = vpop.f32.mrb[0].mxu0
          %v1036 = vadd.f32 0.0, %v1035
          %v1037 = vpop.f32.mrb[0].mxu0
          %v1038 = vadd.f32 0.0, %v1037
          %1039 = vmatprep.mubr.bf16.mxu0 0
          %1040 = vmatmul.mubr.bf16.gmra.mrb[0].mxu0 %v490
          %v1041 = vpop.f32.mrb[0].mxu0
          %v1042 = vadd.f32 0.0, %v1041
          %v1043 = vpop.f32.mrb[0].mxu0
          %v1044 = vadd.f32 0.0, %v1043
          %v1045 = vpop.f32.mrb[0].mxu0
          %v1046 = vadd.f32 0.0, %v1045
          %v1047 = vpop.f32.mrb[0].mxu0
          %v1048 = vadd.f32 0.0, %v1047
          %1049 = vmatprep.mubr.bf16.mxu0 0
          %1050 = vmatmul.mubr.bf16.gmra.mrb[0].mxu0 %v493
          %v1051 = vpop.f32.mrb[0].mxu0
          %v1052 = vadd.f32 0.0, %v1051
          %v1053 = vpop.f32.mrb[0].mxu0
          %v1054 = vadd.f32 0.0, %v1053
          %v1055 = vpop.f32.mrb[0].mxu0
          %v1056 = vadd.f32 0.0, %v1055
          %v1057 = vpop.f32.mrb[0].mxu0
          %v1058 = vadd.f32 0.0, %v1057
          %1059 = vmatprep.mubr.bf16.mxu0 0
          %1060 = vmatmul.mubr.bf16.gmra.mrb[0].mxu0 %v496
          %v1061 = vpop.f32.mrb[0].mxu0
          %v1062 = vadd.f32 0.0, %v1061
          %v1063 = vpop.f32.mrb[0].mxu0
          %v1064 = vadd.f32 0.0, %v1063
          %v1065 = vpop.f32.mrb[0].mxu0
          %v1066 = vadd.f32 0.0, %v1065
          %v1067 = vpop.f32.mrb[0].mxu0
          %v1068 = vadd.f32 0.0, %v1067
          %1069 = vmatprep.mubr.bf16.mxu0 0
          %1070 = vmatmul.mubr.bf16.gmra.mrb[0].mxu0 %v499
          %v1071 = vpop.f32.mrb[0].mxu0
          %v1072 = vadd.f32 0.0, %v1071
          %v1073 = vpop.f32.mrb[0].mxu0
          %v1074 = vadd.f32 0.0, %v1073
          %v1075 = vpop.f32.mrb[0].mxu0
          %v1076 = vadd.f32 0.0, %v1075
          %v1077 = vpop.f32.mrb[0].mxu0
          %v1078 = vadd.f32 0.0, %v1077
          %1079 = vdwg.mxu0
          %1080 = vmatprep.subr.bf16.mxu0 %v443
          %1081 = vmatpush1.bf16.msra.mxu0 %v442
          %1082 = vmatprep.subr.bf16.mxu0 0
          %1083 = vmatpush1.bf16.msra.mxu0 0
          %1084 = vmatprep.subr.bf16.mxu0 0
          %1085 = vmatpush1.bf16.msra.mxu0 0
          %1086 = vmatprep.subr.bf16.mxu0 0
          %1087 = vmatpush1.bf16.msra.mxu0 0
          %1088 = vmatprep.subr.bf16.mxu0 0
          %1089 = vmatpush1.bf16.msra.mxu0 0
          %1090 = vmatprep.subr.bf16.mxu0 0
          %1091 = vmatpush1.bf16.msra.mxu0 0
          %1092 = vmatprep.subr.bf16.mxu0 0
          %1093 = vmatpush1.bf16.msra.mxu0 0
          %1094 = vmatprep.subr.bf16.mxu0 0
          %1095 = vmatpush1.bf16.msra.mxu0 0
          %1096 = vmatprep.subr.bf16.mxu0 0
          %1097 = vmatpush1.bf16.msra.mxu0 0
          %1098 = vmatprep.subr.bf16.mxu0 0
          %1099 = vmatpush1.bf16.msra.mxu0 0
          %1100 = vmatprep.subr.bf16.mxu0 0
          %1101 = vmatpush1.bf16.msra.mxu0 0
          %1102 = vmatprep.subr.bf16.mxu0 0
          %1103 = vmatpush1.bf16.msra.mxu0 0
          %1104 = vmatprep.subr.bf16.mxu0 0
          %1105 = vmatpush1.bf16.msra.mxu0 0
          %1106 = vmatprep.subr.bf16.mxu0 0
          %1107 = vmatpush1.bf16.msra.mxu0 0
          %1108 = vmatprep.subr.bf16.mxu0 0
          %1109 = vmatpush1.bf16.msra.mxu0 0
          %1110 = vmatprep.subr.bf16.mxu0 0
          %1111 = vmatpush1.bf16.msra.mxu0 0
          %1112 = vmatprep.mubr.bf16.mxu0 0
          %1113 = vmatmul.mubr.bf16.gmra.mrb[0].mxu0 %v454
          %v1114 = vpop.f32.mrb[0].mxu0
          %v1115 = vadd.f32 0.0, %v1114
          %v1116 = vpop.f32.mrb[0].mxu0
          %v1117 = vadd.f32 0.0, %v1116
          %v1118 = vpop.f32.mrb[0].mxu0
          %v1119 = vadd.f32 0.0, %v1118
          %v1120 = vpop.f32.mrb[0].mxu0
          %v1121 = vadd.f32 0.0, %v1120
          %1122 = vmatprep.mubr.bf16.mxu0 0
          %1123 = vmatmul.mubr.bf16.gmra.mrb[0].mxu0 %v457
          %v1124 = vpop.f32.mrb[0].mxu0
          %v1125 = vadd.f32 0.0, %v1124
          %v1126 = vpop.f32.mrb[0].mxu0
          %v1127 = vadd.f32 0.0, %v1126
          %v1128 = vpop.f32.mrb[0].mxu0
          %v1129 = vadd.f32 0.0, %v1128
          %v1130 = vpop.f32.mrb[0].mxu0
          %v1131 = vadd.f32 0.0, %v1130
          %1132 = vmatprep.mubr.bf16.mxu0 0
          %1133 = vmatmul.mubr.bf16.gmra.mrb[0].mxu0 %v460
          %v1134 = vpop.f32.mrb[0].mxu0
          %v1135 = vadd.f32 0.0, %v1134
          %v1136 = vpop.f32.mrb[0].mxu0
          %v1137 = vadd.f32 0.0, %v1136
          %v1138 = vpop.f32.mrb[0].mxu0
          %v1139 = vadd.f32 0.0, %v1138
          %v1140 = vpop.f32.mrb[0].mxu0
          %v1141 = vadd.f32 0.0, %v1140
          %1142 = vmatprep.mubr.bf16.mxu0 0
          %1143 = vmatmul.mubr.bf16.gmra.mrb[0].mxu0 %v463
          %v1144 = vpop.f32.mrb[0].mxu0
          %v1145 = vadd.f32 0.0, %v1144
          %v1146 = vpop.f32.mrb[0].mxu0
          %v1147 = vadd.f32 0.0, %v1146
          %v1148 = vpop.f32.mrb[0].mxu0
          %v1149 = vadd.f32 0.0, %v1148
          %v1150 = vpop.f32.mrb[0].mxu0
          %v1151 = vadd.f32 0.0, %v1150
          %1152 = vmatprep.mubr.bf16.mxu0 0
          %1153 = vmatmul.mubr.bf16.gmra.mrb[0].mxu0 %v466
          %v1154 = vpop.f32.mrb[0].mxu0
          %v1155 = vadd.f32 0.0, %v1154
          %v1156 = vpop.f32.mrb[0].mxu0
          %v1157 = vadd.f32 0.0, %v1156
          %v1158 = vpop.f32.mrb[0].mxu0
          %v1159 = vadd.f32 0.0, %v1158
          %v1160 = vpop.f32.mrb[0].mxu0
          %v1161 = vadd.f32 0.0, %v1160
          %1162 = vmatprep.mubr.bf16.mxu0 0
          %1163 = vmatmul.mubr.bf16.gmra.mrb[0].mxu0 %v469
          %v1164 = vpop.f32.mrb[0].mxu0
          %v1165 = vadd.f32 0.0, %v1164
          %v1166 = vpop.f32.mrb[0].mxu0
          %v1167 = vadd.f32 0.0, %v1166
          %v1168 = vpop.f32.mrb[0].mxu0
          %v1169 = vadd.f32 0.0, %v1168
          %v1170 = vpop.f32.mrb[0].mxu0
          %v1171 = vadd.f32 0.0, %v1170
          %1172 = vmatprep.mubr.bf16.mxu0 0
          %1173 = vmatmul.mubr.bf16.gmra.mrb[0].mxu0 %v472
          %v1174 = vpop.f32.mrb[0].mxu0
          %v1175 = vadd.f32 0.0, %v1174
          %v1176 = vpop.f32.mrb[0].mxu0
          %v1177 = vadd.f32 0.0, %v1176
          %v1178 = vpop.f32.mrb[0].mxu0
          %v1179 = vadd.f32 0.0, %v1178
          %v1180 = vpop.f32.mrb[0].mxu0
          %v1181 = vadd.f32 0.0, %v1180
          %1182 = vmatprep.mubr.bf16.mxu0 0
          %1183 = vmatmul.mubr.bf16.gmra.mrb[0].mxu0 %v475
          %v1184 = vpop.f32.mrb[0].mxu0
          %v1185 = vadd.f32 0.0, %v1184
          %v1186 = vpop.f32.mrb[0].mxu0
          %v1187 = vadd.f32 0.0, %v1186
          %v1188 = vpop.f32.mrb[0].mxu0
          %v1189 = vadd.f32 0.0, %v1188
          %v1190 = vpop.f32.mrb[0].mxu0
          %v1191 = vadd.f32 0.0, %v1190
          %1192 = vmatprep.mubr.bf16.mxu0 0
          %1193 = vmatmul.mubr.bf16.gmra.mrb[0].mxu0 %v478
          %v1194 = vpop.f32.mrb[0].mxu0
          %v1195 = vadd.f32 0.0, %v1194
          %v1196 = vpop.f32.mrb[0].mxu0
          %v1197 = vadd.f32 0.0, %v1196
          %v1198 = vpop.f32.mrb[0].mxu0
          %v1199 = vadd.f32 0.0, %v1198
          %v1200 = vpop.f32.mrb[0].mxu0
          %v1201 = vadd.f32 0.0, %v1200
          %1202 = vmatprep.mubr.bf16.mxu0 0
          %1203 = vmatmul.mubr.bf16.gmra.mrb[0].mxu0 %v481
          %v1204 = vpop.f32.mrb[0].mxu0
          %v1205 = vadd.f32 0.0, %v1204
          %v1206 = vpop.f32.mrb[0].mxu0
          %v1207 = vadd.f32 0.0, %v1206
          %v1208 = vpop.f32.mrb[0].mxu0
          %v1209 = vadd.f32 0.0, %v1208
          %v1210 = vpop.f32.mrb[0].mxu0
          %v1211 = vadd.f32 0.0, %v1210
          %1212 = vmatprep.mubr.bf16.mxu0 0
          %1213 = vmatmul.mubr.bf16.gmra.mrb[0].mxu0 %v484
          %v1214 = vpop.f32.mrb[0].mxu0
          %v1215 = vadd.f32 0.0, %v1214
          %v1216 = vpop.f32.mrb[0].mxu0
          %v1217 = vadd.f32 0.0, %v1216
          %v1218 = vpop.f32.mrb[0].mxu0
          %v1219 = vadd.f32 0.0, %v1218
          %v1220 = vpop.f32.mrb[0].mxu0
          %v1221 = vadd.f32 0.0, %v1220
          %1222 = vmatprep.mubr.bf16.mxu0 0
          %1223 = vmatmul.mubr.bf16.gmra.mrb[0].mxu0 %v487
          %v1224 = vpop.f32.mrb[0].mxu0
          %v1225 = vadd.f32 0.0, %v1224
          %v1226 = vpop.f32.mrb[0].mxu0
          %v1227 = vadd.f32 0.0, %v1226
          %v1228 = vpop.f32.mrb[0].mxu0
          %v1229 = vadd.f32 0.0, %v1228
          %v1230 = vpop.f32.mrb[0].mxu0
          %v1231 = vadd.f32 0.0, %v1230
          %1232 = vmatprep.mubr.bf16.mxu0 0
          %1233 = vmatmul.mubr.bf16.gmra.mrb[0].mxu0 %v490
          %v1234 = vpop.f32.mrb[0].mxu0
          %v1235 = vadd.f32 0.0, %v1234
          %v1236 = vpop.f32.mrb[0].mxu0
          %v1237 = vadd.f32 0.0, %v1236
          %v1238 = vpop.f32.mrb[0].mxu0
          %v1239 = vadd.f32 0.0, %v1238
          %v1240 = vpop.f32.mrb[0].mxu0
          %v1241 = vadd.f32 0.0, %v1240
          %1242 = vmatprep.mubr.bf16.mxu0 0
          %1243 = vmatmul.mubr.bf16.gmra.mrb[0].mxu0 %v493
          %v1244 = vpop.f32.mrb[0].mxu0
          %v1245 = vadd.f32 0.0, %v1244
          %v1246 = vpop.f32.mrb[0].mxu0
          %v1247 = vadd.f32 0.0, %v1246
          %v1248 = vpop.f32.mrb[0].mxu0
          %v1249 = vadd.f32 0.0, %v1248
          %v1250 = vpop.f32.mrb[0].mxu0
          %v1251 = vadd.f32 0.0, %v1250
          %1252 = vmatprep.mubr.bf16.mxu0 0
          %1253 = vmatmul.mubr.bf16.gmra.mrb[0].mxu0 %v496
          %v1254 = vpop.f32.mrb[0].mxu0
          %v1255 = vadd.f32 0.0, %v1254
          %v1256 = vpop.f32.mrb[0].mxu0
          %v1257 = vadd.f32 0.0, %v1256
          %v1258 = vpop.f32.mrb[0].mxu0
          %v1259 = vadd.f32 0.0, %v1258
          %v1260 = vpop.f32.mrb[0].mxu0
          %v1261 = vadd.f32 0.0, %v1260
          %1262 = vmatprep.mubr.bf16.mxu0 0
          %1263 = vmatmul.mubr.bf16.gmra.mrb[0].mxu0 %v499
          %v1264 = vpop.f32.mrb[0].mxu0
          %v1265 = vadd.f32 0.0, %v1264
          %v1266 = vpop.f32.mrb[0].mxu0
          %v1267 = vadd.f32 0.0, %v1266
          %v1268 = vpop.f32.mrb[0].mxu0
          %v1269 = vadd.f32 0.0, %v1268
          %v1270 = vpop.f32.mrb[0].mxu0
          %v1271 = vadd.f32 0.0, %v1270
          %1272 = vdwg.mxu0
          %v1273 = vmin.f32 %v536, %v540
          %v1274 = vmin.f32 %v1273, %v546
          %v1275 = vmin.f32 %v1274, %v550
          %v1276 = vmin.f32 %v1275, %v556
          %v1277 = vmin.f32 %v1276, %v560
          %v1278 = vmin.f32 %v1277, %v566
          %v1279 = vmin.f32 %v1278, %v570
          %v1280 = vmin.f32 %v1279, %v576
          %v1281 = vmin.f32 %v1280, %v580
          %v1282 = vmin.f32 %v1281, %v586
          %v1283 = vmin.f32 %v1282, %v590
          %v1284 = vmin.f32 %v1283, %v596
          %v1285 = vmin.f32 %v1284, %v600
          %v1286 = vmin.f32 %v1285, %v606
          %v1287 = vmin.f32 %v1286, %v610
          %v1288 = vmin.f32 %v1287, %v616
          %v1289 = vmin.f32 %v1288, %v620
          %v1290 = vmin.f32 %v1289, %v626
          %v1291 = vmin.f32 %v1290, %v630
          %v1292 = vmin.f32 %v1291, %v636
          %v1293 = vmin.f32 %v1292, %v640
          %v1294 = vmin.f32 %v1293, %v646
          %v1295 = vmin.f32 %v1294, %v650
          %v1296 = vmin.f32 %v1295, %v656
          %v1297 = vmin.f32 %v1296, %v660
          %v1298 = vmin.f32 %v1297, %v666
          %v1299 = vmin.f32 %v1298, %v670
          %v1300 = vmin.f32 %v1299, %v676
          %v1301 = vmin.f32 %v1300, %v680
          %v1302 = vmin.f32 %v1301, %v686
          %v1303 = vmin.f32 %v1302, %v690
          %v1304 = vmin.f32 %v538, %v542
          %v1305 = vmin.f32 %v1304, %v548
          %v1306 = vmin.f32 %v1305, %v552
          %v1307 = vmin.f32 %v1306, %v558
          %v1308 = vmin.f32 %v1307, %v562
          %v1309 = vmin.f32 %v1308, %v568
          %v1310 = vmin.f32 %v1309, %v572
          %v1311 = vmin.f32 %v1310, %v578
          %v1312 = vmin.f32 %v1311, %v582
          %v1313 = vmin.f32 %v1312, %v588
          %v1314 = vmin.f32 %v1313, %v592
          %v1315 = vmin.f32 %v1314, %v598
          %v1316 = vmin.f32 %v1315, %v602
          %v1317 = vmin.f32 %v1316, %v608
          %v1318 = vmin.f32 %v1317, %v612
          %v1319 = vmin.f32 %v1318, %v618
          %v1320 = vmin.f32 %v1319, %v622
          %v1321 = vmin.f32 %v1320, %v628
          %v1322 = vmin.f32 %v1321, %v632
          %v1323 = vmin.f32 %v1322, %v638
          %v1324 = vmin.f32 %v1323, %v642
          %v1325 = vmin.f32 %v1324, %v648
          %v1326 = vmin.f32 %v1325, %v652
          %v1327 = vmin.f32 %v1326, %v658
          %v1328 = vmin.f32 %v1327, %v662
          %v1329 = vmin.f32 %v1328, %v668
          %v1330 = vmin.f32 %v1329, %v672
          %v1331 = vmin.f32 %v1330, %v678
          %v1332 = vmin.f32 %v1331, %v682
          %v1333 = vmin.f32 %v1332, %v688
          %v1334 = vmin.f32 %v1333, %v692
          %v1335 = vmin.f32 %v729, %v733
          %v1336 = vmin.f32 %v1335, %v739
          %v1337 = vmin.f32 %v1336, %v743
          %v1338 = vmin.f32 %v1337, %v749
          %v1339 = vmin.f32 %v1338, %v753
          %v1340 = vmin.f32 %v1339, %v759
          %v1341 = vmin.f32 %v1340, %v763
          %v1342 = vmin.f32 %v1341, %v769
          %v1343 = vmin.f32 %v1342, %v773
          %v1344 = vmin.f32 %v1343, %v779
          %v1345 = vmin.f32 %v1344, %v783
          %v1346 = vmin.f32 %v1345, %v789
          %v1347 = vmin.f32 %v1346, %v793
          %v1348 = vmin.f32 %v1347, %v799
          %v1349 = vmin.f32 %v1348, %v803
          %v1350 = vmin.f32 %v1349, %v809
          %v1351 = vmin.f32 %v1350, %v813
          %v1352 = vmin.f32 %v1351, %v819
          %v1353 = vmin.f32 %v1352, %v823
          %v1354 = vmin.f32 %v1353, %v829
          %v1355 = vmin.f32 %v1354, %v833
          %v1356 = vmin.f32 %v1355, %v839
          %v1357 = vmin.f32 %v1356, %v843
          %v1358 = vmin.f32 %v1357, %v849
          %v1359 = vmin.f32 %v1358, %v853
          %v1360 = vmin.f32 %v1359, %v859
          %v1361 = vmin.f32 %v1360, %v863
          %v1362 = vmin.f32 %v1361, %v869
          %v1363 = vmin.f32 %v1362, %v873
          %v1364 = vmin.f32 %v1363, %v879
          %v1365 = vmin.f32 %v1364, %v883
          %v1366 = vmin.f32 %v731, %v735
          %v1367 = vmin.f32 %v1366, %v741
          %v1368 = vmin.f32 %v1367, %v745
          %v1369 = vmin.f32 %v1368, %v751
          %v1370 = vmin.f32 %v1369, %v755
          %v1371 = vmin.f32 %v1370, %v761
          %v1372 = vmin.f32 %v1371, %v765
          %v1373 = vmin.f32 %v1372, %v771
          %v1374 = vmin.f32 %v1373, %v775
          %v1375 = vmin.f32 %v1374, %v781
          %v1376 = vmin.f32 %v1375, %v785
          %v1377 = vmin.f32 %v1376, %v791
          %v1378 = vmin.f32 %v1377, %v795
          %v1379 = vmin.f32 %v1378, %v801
          %v1380 = vmin.f32 %v1379, %v805
          %v1381 = vmin.f32 %v1380, %v811
          %v1382 = vmin.f32 %v1381, %v815
          %v1383 = vmin.f32 %v1382, %v821
          %v1384 = vmin.f32 %v1383, %v825
          %v1385 = vmin.f32 %v1384, %v831
          %v1386 = vmin.f32 %v1385, %v835
          %v1387 = vmin.f32 %v1386, %v841
          %v1388 = vmin.f32 %v1387, %v845
          %v1389 = vmin.f32 %v1388, %v851
          %v1390 = vmin.f32 %v1389, %v855
          %v1391 = vmin.f32 %v1390, %v861
          %v1392 = vmin.f32 %v1391, %v865
          %v1393 = vmin.f32 %v1392, %v871
          %v1394 = vmin.f32 %v1393, %v875
          %v1395 = vmin.f32 %v1394, %v881
          %v1396 = vmin.f32 %v1395, %v885
          %v1397 = vmin.f32 %v922, %v926
          %v1398 = vmin.f32 %v1397, %v932
          %v1399 = vmin.f32 %v1398, %v936
          %v1400 = vmin.f32 %v1399, %v942
          %v1401 = vmin.f32 %v1400, %v946
          %v1402 = vmin.f32 %v1401, %v952
          %v1403 = vmin.f32 %v1402, %v956
          %v1404 = vmin.f32 %v1403, %v962
          %v1405 = vmin.f32 %v1404, %v966
          %v1406 = vmin.f32 %v1405, %v972
          %v1407 = vmin.f32 %v1406, %v976
          %v1408 = vmin.f32 %v1407, %v982
          %v1409 = vmin.f32 %v1408, %v986
          %v1410 = vmin.f32 %v1409, %v992
          %v1411 = vmin.f32 %v1410, %v996
          %v1412 = vmin.f32 %v1411, %v1002
          %v1413 = vmin.f32 %v1412, %v1006
          %v1414 = vmin.f32 %v1413, %v1012
          %v1415 = vmin.f32 %v1414, %v1016
          %v1416 = vmin.f32 %v1415, %v1022
          %v1417 = vmin.f32 %v1416, %v1026
          %v1418 = vmin.f32 %v1417, %v1032
          %v1419 = vmin.f32 %v1418, %v1036
          %v1420 = vmin.f32 %v1419, %v1042
          %v1421 = vmin.f32 %v1420, %v1046
          %v1422 = vmin.f32 %v1421, %v1052
          %v1423 = vmin.f32 %v1422, %v1056
          %v1424 = vmin.f32 %v1423, %v1062
          %v1425 = vmin.f32 %v1424, %v1066
          %v1426 = vmin.f32 %v1425, %v1072
          %v1427 = vmin.f32 %v1426, %v1076
          %v1428 = vmin.f32 %v924, %v928
          %v1429 = vmin.f32 %v1428, %v934
          %v1430 = vmin.f32 %v1429, %v938
          %v1431 = vmin.f32 %v1430, %v944
          %v1432 = vmin.f32 %v1431, %v948
          %v1433 = vmin.f32 %v1432, %v954
          %v1434 = vmin.f32 %v1433, %v958
          %v1435 = vmin.f32 %v1434, %v964
          %v1436 = vmin.f32 %v1435, %v968
          %v1437 = vmin.f32 %v1436, %v974
          %v1438 = vmin.f32 %v1437, %v978
          %v1439 = vmin.f32 %v1438, %v984
          %v1440 = vmin.f32 %v1439, %v988
          %v1441 = vmin.f32 %v1440, %v994
          %v1442 = vmin.f32 %v1441, %v998
          %v1443 = vmin.f32 %v1442, %v1004
          %v1444 = vmin.f32 %v1443, %v1008
          %v1445 = vmin.f32 %v1444, %v1014
          %v1446 = vmin.f32 %v1445, %v1018
          %v1447 = vmin.f32 %v1446, %v1024
          %v1448 = vmin.f32 %v1447, %v1028
          %v1449 = vmin.f32 %v1448, %v1034
          %v1450 = vmin.f32 %v1449, %v1038
          %v1451 = vmin.f32 %v1450, %v1044
          %v1452 = vmin.f32 %v1451, %v1048
          %v1453 = vmin.f32 %v1452, %v1054
          %v1454 = vmin.f32 %v1453, %v1058
          %v1455 = vmin.f32 %v1454, %v1064
          %v1456 = vmin.f32 %v1455, %v1068
          %v1457 = vmin.f32 %v1456, %v1074
          %v1458 = vmin.f32 %v1457, %v1078
          %v1459 = vmin.f32 %v1115, %v1119
          %v1460 = vmin.f32 %v1459, %v1125
          %v1461 = vmin.f32 %v1460, %v1129
          %v1462 = vmin.f32 %v1461, %v1135
          %v1463 = vmin.f32 %v1462, %v1139
          %v1464 = vmin.f32 %v1463, %v1145
          %v1465 = vmin.f32 %v1464, %v1149
          %v1466 = vmin.f32 %v1465, %v1155
          %v1467 = vmin.f32 %v1466, %v1159
          %v1468 = vmin.f32 %v1467, %v1165
          %v1469 = vmin.f32 %v1468, %v1169
          %v1470 = vmin.f32 %v1469, %v1175
          %v1471 = vmin.f32 %v1470, %v1179
          %v1472 = vmin.f32 %v1471, %v1185
          %v1473 = vmin.f32 %v1472, %v1189
          %v1474 = vmin.f32 %v1473, %v1195
          %v1475 = vmin.f32 %v1474, %v1199
          %v1476 = vmin.f32 %v1475, %v1205
          %v1477 = vmin.f32 %v1476, %v1209
          %v1478 = vmin.f32 %v1477, %v1215
          %v1479 = vmin.f32 %v1478, %v1219
          %v1480 = vmin.f32 %v1479, %v1225
          %v1481 = vmin.f32 %v1480, %v1229
          %v1482 = vmin.f32 %v1481, %v1235
          %v1483 = vmin.f32 %v1482, %v1239
          %v1484 = vmin.f32 %v1483, %v1245
          %v1485 = vmin.f32 %v1484, %v1249
          %v1486 = vmin.f32 %v1485, %v1255
          %v1487 = vmin.f32 %v1486, %v1259
          %v1488 = vmin.f32 %v1487, %v1265
          %v1489 = vmin.f32 %v1488, %v1269
          %v1490 = vmin.f32 %v1117, %v1121
          %v1491 = vmin.f32 %v1490, %v1127
          %v1492 = vmin.f32 %v1491, %v1131
          %v1493 = vmin.f32 %v1492, %v1137
          %v1494 = vmin.f32 %v1493, %v1141
          %v1495 = vmin.f32 %v1494, %v1147
          %v1496 = vmin.f32 %v1495, %v1151
          %v1497 = vmin.f32 %v1496, %v1157
          %v1498 = vmin.f32 %v1497, %v1161
          %v1499 = vmin.f32 %v1498, %v1167
          %v1500 = vmin.f32 %v1499, %v1171
          %v1501 = vmin.f32 %v1500, %v1177
          %v1502 = vmin.f32 %v1501, %v1181
          %v1503 = vmin.f32 %v1502, %v1187
          %v1504 = vmin.f32 %v1503, %v1191
          %v1505 = vmin.f32 %v1504, %v1197
          %v1506 = vmin.f32 %v1505, %v1201
          %v1507 = vmin.f32 %v1506, %v1207
          %v1508 = vmin.f32 %v1507, %v1211
          %v1509 = vmin.f32 %v1508, %v1217
          %v1510 = vmin.f32 %v1509, %v1221
          %v1511 = vmin.f32 %v1510, %v1227
          %v1512 = vmin.f32 %v1511, %v1231
          %v1513 = vmin.f32 %v1512, %v1237
          %v1514 = vmin.f32 %v1513, %v1241
          %v1515 = vmin.f32 %v1514, %v1247
          %v1516 = vmin.f32 %v1515, %v1251
          %v1517 = vmin.f32 %v1516, %v1257
          %v1518 = vmin.f32 %v1517, %v1261
          %v1519 = vmin.f32 %v1518, %v1267
          %v1520 = vmin.f32 %v1519, %v1271
          %v1521 = vld [vmem:[#allocation2] sm:$0xff]
          %v1522 = vld [vmem:[#allocation2 + $0x8] sm:$0xff]
          %v1523 = vld [vmem:[#allocation2 + $0x10] sm:$0xff]
          %v1524 = vld [vmem:[#allocation2 + $0x18] sm:$0xff]
          %v1525 = vld [vmem:[#allocation2 + $0x20] sm:$0xff]
          %v1526 = vld [vmem:[#allocation2 + $0x28] sm:$0xff]
          %v1527 = vld [vmem:[#allocation2 + $0x30] sm:$0xff]
          %v1528 = vld [vmem:[#allocation2 + $0x38] sm:$0xff]
          %v1529 = vmin.f32 %v1521, %v1303
          %v1530 = vmin.f32 %v1522, %v1334
          %v1531 = vmin.f32 %v1523, %v1365
          %v1532 = vmin.f32 %v1524, %v1396
          %v1533 = vmin.f32 %v1525, %v1427
          %v1534 = vmin.f32 %v1526, %v1458
          %v1535 = vmin.f32 %v1527, %v1489
          %v1536 = vmin.f32 %v1528, %v1520
          %1537 = vst [vmem:[#allocation2] sm:$0xff] %v1529
          %1538 = vst [vmem:[#allocation2 + $0x8] sm:$0xff] %v1530
          %1539 = vst [vmem:[#allocation2 + $0x10] sm:$0xff] %v1531
          %1540 = vst [vmem:[#allocation2 + $0x18] sm:$0xff] %v1532
          %1541 = vst [vmem:[#allocation2 + $0x20] sm:$0xff] %v1533
          %1542 = vst [vmem:[#allocation2 + $0x28] sm:$0xff] %v1534
          %1543 = vst [vmem:[#allocation2 + $0x30] sm:$0xff] %v1535
          %1544 = vst [vmem:[#allocation2 + $0x38] sm:$0xff] %v1536
        $region64: #{surface_loss.1} parent=54 // loop_footer
          %s292 = sadd.s32 %s290, 1
        $region65: #{surface_loss.1} parent=54 // loop_footer_branch
          %289 = sbr.rel target = $region61
        $region66: #{surface_loss.1} parent=54 // loop_exit
          _
        %v1545 = vld [vmem:[#allocation2] sm:$0xff]
        %v1546 = vld [vmem:[#allocation2 + $0x8] sm:$0xff]
        %v1547 = vld [vmem:[#allocation2 + $0x10] sm:$0xff]
        %v1548 = vld [vmem:[#allocation2 + $0x18] sm:$0xff]
        %v1549 = vld [vmem:[#allocation2 + $0x20] sm:$0xff]
        %v1550 = vld [vmem:[#allocation2 + $0x28] sm:$0xff]
        %v1551 = vld [vmem:[#allocation2 + $0x30] sm:$0xff]
        %v1552 = vld [vmem:[#allocation2 + $0x38] sm:$0xff]
        %v1553 = vrot.slane %v1545, 4
        %v1554 = vmin.f32 %v1545, %v1553
        %v1555 = vrot.slane %v1554, 2
        %v1556 = vmin.f32 %v1554, %v1555
        %v1557 = vrot.slane %v1556, 1
        %v1558 = vmin.f32 %v1556, %v1557
        %v1559 = vrot.slane %v1546, 4
        %v1560 = vmin.f32 %v1546, %v1559
        %v1561 = vrot.slane %v1560, 2
        %v1562 = vmin.f32 %v1560, %v1561
        %v1563 = vrot.slane %v1562, 1
        %v1564 = vmin.f32 %v1562, %v1563
        %v1565 = vrot.slane %v1547, 4
        %v1566 = vmin.f32 %v1547, %v1565
        %v1567 = vrot.slane %v1566, 2
        %v1568 = vmin.f32 %v1566, %v1567
        %v1569 = vrot.slane %v1568, 1
        %v1570 = vmin.f32 %v1568, %v1569
        %v1571 = vrot.slane %v1548, 4
        %v1572 = vmin.f32 %v1548, %v1571
        %v1573 = vrot.slane %v1572, 2
        %v1574 = vmin.f32 %v1572, %v1573
        %v1575 = vrot.slane %v1574, 1
        %v1576 = vmin.f32 %v1574, %v1575
        %v1577 = vrot.slane %v1549, 4
        %v1578 = vmin.f32 %v1549, %v1577
        %v1579 = vrot.slane %v1578, 2
        %v1580 = vmin.f32 %v1578, %v1579
        %v1581 = vrot.slane %v1580, 1
        %v1582 = vmin.f32 %v1580, %v1581
        %v1583 = vrot.slane %v1550, 4
        %v1584 = vmin.f32 %v1550, %v1583
        %v1585 = vrot.slane %v1584, 2
        %v1586 = vmin.f32 %v1584, %v1585
        %v1587 = vrot.slane %v1586, 1
        %v1588 = vmin.f32 %v1586, %v1587
        %v1589 = vrot.slane %v1551, 4
        %v1590 = vmin.f32 %v1551, %v1589
        %v1591 = vrot.slane %v1590, 2
        %v1592 = vmin.f32 %v1590, %v1591
        %v1593 = vrot.slane %v1592, 1
        %v1594 = vmin.f32 %v1592, %v1593
        %v1595 = vrot.slane %v1552, 4
        %v1596 = vmin.f32 %v1552, %v1595
        %v1597 = vrot.slane %v1596, 2
        %v1598 = vmin.f32 %v1596, %v1597
        %v1599 = vrot.slane %v1598, 1
        %v1600 = vmin.f32 %v1598, %v1599
        %v1601 = vmax.f32 %v1558, 0.0
        %v1602 = vmax.f32 %v1564, 0.0
        %v1603 = vmax.f32 %v1570, 0.0
        %v1604 = vmax.f32 %v1576, 0.0
        %v1605 = vmax.f32 %v1582, 0.0
        %v1606 = vmax.f32 %v1588, 0.0
        %v1607 = vmax.f32 %v1594, 0.0
        %v1608 = vmax.f32 %v1600, 0.0
        %v1609 = vrsqrt.pop %v1601
        %v1610 = vmul.f32 %v1601, %v1609
        %vm1611 = vcmp.eq.f32.partialorder %v1601, inf
        %v1612 = vsel %vm1611, %v1601, %v1610
        %vm1613 = vcmp.eq.f32.partialorder %v1601, 0.0
        %v1614 = vand.u32 %v1601, 2147483648
        %v1615 = vsel %vm1613, %v1614, %v1612
        %v1616 = vrsqrt.pop %v1602
        %v1617 = vmul.f32 %v1602, %v1616
        %vm1618 = vcmp.eq.f32.partialorder %v1602, inf
        %v1619 = vsel %vm1618, %v1602, %v1617
        %vm1620 = vcmp.eq.f32.partialorder %v1602, 0.0
        %v1621 = vand.u32 %v1602, 2147483648
        %v1622 = vsel %vm1620, %v1621, %v1619
        %v1623 = vrsqrt.pop %v1603
        %v1624 = vmul.f32 %v1603, %v1623
        %vm1625 = vcmp.eq.f32.partialorder %v1603, inf
        %v1626 = vsel %vm1625, %v1603, %v1624
        %vm1627 = vcmp.eq.f32.partialorder %v1603, 0.0
        %v1628 = vand.u32 %v1603, 2147483648
        %v1629 = vsel %vm1627, %v1628, %v1626
        %v1630 = vrsqrt.pop %v1604
        %v1631 = vmul.f32 %v1604, %v1630
        %vm1632 = vcmp.eq.f32.partialorder %v1604, inf
        %v1633 = vsel %vm1632, %v1604, %v1631
        %vm1634 = vcmp.eq.f32.partialorder %v1604, 0.0
        %v1635 = vand.u32 %v1604, 2147483648
        %v1636 = vsel %vm1634, %v1635, %v1633
        %v1637 = vrsqrt.pop %v1605
        %v1638 = vmul.f32 %v1605, %v1637
        %vm1639 = vcmp.eq.f32.partialorder %v1605, inf
        %v1640 = vsel %vm1639, %v1605, %v1638
        %vm1641 = vcmp.eq.f32.partialorder %v1605, 0.0
        %v1642 = vand.u32 %v1605, 2147483648
        %v1643 = vsel %vm1641, %v1642, %v1640
        %v1644 = vrsqrt.pop %v1606
        %v1645 = vmul.f32 %v1606, %v1644
        %vm1646 = vcmp.eq.f32.partialorder %v1606, inf
        %v1647 = vsel %vm1646, %v1606, %v1645
        %vm1648 = vcmp.eq.f32.partialorder %v1606, 0.0
        %v1649 = vand.u32 %v1606, 2147483648
        %v1650 = vsel %vm1648, %v1649, %v1647
        %v1651 = vrsqrt.pop %v1607
        %v1652 = vmul.f32 %v1607, %v1651
        %vm1653 = vcmp.eq.f32.partialorder %v1607, inf
        %v1654 = vsel %vm1653, %v1607, %v1652
        %vm1655 = vcmp.eq.f32.partialorder %v1607, 0.0
        %v1656 = vand.u32 %v1607, 2147483648
        %v1657 = vsel %vm1655, %v1656, %v1654
        %v1658 = vrsqrt.pop %v1608
        %v1659 = vmul.f32 %v1608, %v1658
        %vm1660 = vcmp.eq.f32.partialorder %v1608, inf
        %v1661 = vsel %vm1660, %v1608, %v1659
        %vm1662 = vcmp.eq.f32.partialorder %v1608, 0.0
        %v1663 = vand.u32 %v1608, 2147483648
        %v1664 = vsel %vm1662, %v1663, %v1661
        %v1665 = vld [vmem:[%s260] sm:$0xff]
        %v1666 = vxor.u32 %v1665, 2147483648
        %v1667 = vmul.f32 %v1666, 1.442695
        %v1668 = vpow.pop %v1667
        %v1669 = vadd.f32 %v1668, 1.0
        %v1670 = vrcp.pop %v1669
        %v1671 = vmul.f32 1.0, %v1670
        %v1672 = vld [vmem:[%s265] sm:$0xff]
        %v1673 = vmul.f32 %v1671, %v1672
        %v1675 = vlaneseq
        %v1676 = vshrl.u32 %v1675, 7
        %v1677 = vsub.s32 0, %v1676
        %v1678 = vrot.slane %v1673, %v1677
        %v1679 = vlaneseq
        %v1680 = vshrl.u32 %v1679, 7
        %v1681 = vsub.s32 1, %v1680
        %v1682 = vrot.slane %v1673, %v1681
        %v1683 = vlaneseq
        %v1684 = vshrl.u32 %v1683, 7
        %v1685 = vsub.s32 2, %v1684
        %v1686 = vrot.slane %v1673, %v1685
        %v1687 = vlaneseq
        %v1688 = vshrl.u32 %v1687, 7
        %v1689 = vsub.s32 3, %v1688
        %v1690 = vrot.slane %v1673, %v1689
        %v1691 = vlaneseq
        %v1692 = vshrl.u32 %v1691, 7
        %v1693 = vsub.s32 4, %v1692
        %v1694 = vrot.slane %v1673, %v1693
        %v1695 = vlaneseq
        %v1696 = vshrl.u32 %v1695, 7
        %v1697 = vsub.s32 5, %v1696
        %v1698 = vrot.slane %v1673, %v1697
        %v1699 = vlaneseq
        %v1700 = vshrl.u32 %v1699, 7
        %v1701 = vsub.s32 6, %v1700
        %v1702 = vrot.slane %v1673, %v1701
        %v1703 = vlaneseq
        %v1704 = vshrl.u32 %v1703, 7
        %v1705 = vsub.s32 7, %v1704
        %v1706 = vrot.slane %v1673, %v1705
        %vm1715 = vcmask 1040384
        %v1716 = vsel %vm1715, %v1678, 0.0
        %v1717 = vsel %vm1715, %v1682, 0.0
        %v1718 = vadd.f32 %v1716, %v1717
        %v1719 = vsel %vm1715, %v1686, 0.0
        %v1720 = vadd.f32 %v1718, %v1719
        %v1721 = vsel %vm1715, %v1690, 0.0
        %v1722 = vadd.f32 %v1720, %v1721
        %v1723 = vsel %vm1715, %v1694, 0.0
        %v1724 = vadd.f32 %v1722, %v1723
        %v1725 = vsel %vm1715, %v1698, 0.0
        %v1726 = vadd.f32 %v1724, %v1725
        %v1727 = vsel %vm1715, %v1702, 0.0
        %v1728 = vadd.f32 %v1726, %v1727
        %v1729 = vsel %vm1715, %v1706, 0.0
        %v1730 = vadd.f32 %v1728, %v1729
        %1731 = vadd.xlane.f32.xlu0 %v1730
        %v1732 = vpop.xlane.xlu0 %1731
        %v1733 = vrot.slane %v1732, 4
        %v1734 = vadd.f32 %v1732, %v1733
        %v1735 = vrot.slane %v1734, 2
        %v1736 = vadd.f32 %v1734, %v1735
        %v1737 = vrot.slane %v1736, 1
        %v1738 = vadd.f32 %v1736, %v1737
        %s1739 = vtos %v1738
        %v1741 = vlaneseq
        %v1742 = vshrl.u32 %v1741, 7
        %v1743 = vsub.s32 0, %v1742
        %v1744 = vrot.slane %v1671, %v1743
        %v1745 = vlaneseq
        %v1746 = vshrl.u32 %v1745, 7
        %v1747 = vsub.s32 1, %v1746
        %v1748 = vrot.slane %v1671, %v1747
        %v1749 = vlaneseq
        %v1750 = vshrl.u32 %v1749, 7
        %v1751 = vsub.s32 2, %v1750
        %v1752 = vrot.slane %v1671, %v1751
        %v1753 = vlaneseq
        %v1754 = vshrl.u32 %v1753, 7
        %v1755 = vsub.s32 3, %v1754
        %v1756 = vrot.slane %v1671, %v1755
        %v1757 = vlaneseq
        %v1758 = vshrl.u32 %v1757, 7
        %v1759 = vsub.s32 4, %v1758
        %v1760 = vrot.slane %v1671, %v1759
        %v1761 = vlaneseq
        %v1762 = vshrl.u32 %v1761, 7
        %v1763 = vsub.s32 5, %v1762
        %v1764 = vrot.slane %v1671, %v1763
        %v1765 = vlaneseq
        %v1766 = vshrl.u32 %v1765, 7
        %v1767 = vsub.s32 6, %v1766
        %v1768 = vrot.slane %v1671, %v1767
        %v1769 = vlaneseq
        %v1770 = vshrl.u32 %v1769, 7
        %v1771 = vsub.s32 7, %v1770
        %v1772 = vrot.slane %v1671, %v1771
        %v1781 = vsel %vm1715, %v1744, 0.0
        %v1782 = vsel %vm1715, %v1748, 0.0
        %v1783 = vadd.f32 %v1781, %v1782
        %v1784 = vsel %vm1715, %v1752, 0.0
        %v1785 = vadd.f32 %v1783, %v1784
        %v1786 = vsel %vm1715, %v1756, 0.0
        %v1787 = vadd.f32 %v1785, %v1786
        %v1788 = vsel %vm1715, %v1760, 0.0
        %v1789 = vadd.f32 %v1787, %v1788
        %v1790 = vsel %vm1715, %v1764, 0.0
        %v1791 = vadd.f32 %v1789, %v1790
        %v1792 = vsel %vm1715, %v1768, 0.0
        %v1793 = vadd.f32 %v1791, %v1792
        %v1794 = vsel %vm1715, %v1772, 0.0
        %v1795 = vadd.f32 %v1793, %v1794
        %1796 = vadd.xlane.f32.xlu0 %v1795
        %v1797 = vpop.xlane.xlu0 %1796
        %v1798 = vrot.slane %v1797, 4
        %v1799 = vadd.f32 %v1797, %v1798
        %v1800 = vrot.slane %v1799, 2
        %v1801 = vadd.f32 %v1799, %v1800
        %v1802 = vrot.slane %v1801, 1
        %v1803 = vadd.f32 %v1801, %v1802
        %s1804 = vtos %v1803
        %v1806 = vlaneseq
        %v1807 = vshrl.u32 %v1806, 7
        %v1808 = vsub.s32 0, %v1807
        %v1809 = vrot.slane %v1672, %v1808
        %v1810 = vlaneseq
        %v1811 = vshrl.u32 %v1810, 7
        %v1812 = vsub.s32 1, %v1811
        %v1813 = vrot.slane %v1672, %v1812
        %v1814 = vlaneseq
        %v1815 = vshrl.u32 %v1814, 7
        %v1816 = vsub.s32 2, %v1815
        %v1817 = vrot.slane %v1672, %v1816
        %v1818 = vlaneseq
        %v1819 = vshrl.u32 %v1818, 7
        %v1820 = vsub.s32 3, %v1819
        %v1821 = vrot.slane %v1672, %v1820
        %v1822 = vlaneseq
        %v1823 = vshrl.u32 %v1822, 7
        %v1824 = vsub.s32 4, %v1823
        %v1825 = vrot.slane %v1672, %v1824
        %v1826 = vlaneseq
        %v1827 = vshrl.u32 %v1826, 7
        %v1828 = vsub.s32 5, %v1827
        %v1829 = vrot.slane %v1672, %v1828
        %v1830 = vlaneseq
        %v1831 = vshrl.u32 %v1830, 7
        %v1832 = vsub.s32 6, %v1831
        %v1833 = vrot.slane %v1672, %v1832
        %v1834 = vlaneseq
        %v1835 = vshrl.u32 %v1834, 7
        %v1836 = vsub.s32 7, %v1835
        %v1837 = vrot.slane %v1672, %v1836
        %v1846 = vsel %vm1715, %v1809, 0.0
        %v1847 = vsel %vm1715, %v1813, 0.0
        %v1848 = vadd.f32 %v1846, %v1847
        %v1849 = vsel %vm1715, %v1817, 0.0
        %v1850 = vadd.f32 %v1848, %v1849
        %v1851 = vsel %vm1715, %v1821, 0.0
        %v1852 = vadd.f32 %v1850, %v1851
        %v1853 = vsel %vm1715, %v1825, 0.0
        %v1854 = vadd.f32 %v1852, %v1853
        %v1855 = vsel %vm1715, %v1829, 0.0
        %v1856 = vadd.f32 %v1854, %v1855
        %v1857 = vsel %vm1715, %v1833, 0.0
        %v1858 = vadd.f32 %v1856, %v1857
        %v1859 = vsel %vm1715, %v1837, 0.0
        %v1860 = vadd.f32 %v1858, %v1859
        %1861 = vadd.xlane.f32.xlu0 %v1860
        %v1862 = vpop.xlane.xlu0 %1861
        %v1863 = vrot.slane %v1862, 4
        %v1864 = vadd.f32 %v1862, %v1863
        %v1865 = vrot.slane %v1864, 2
        %v1866 = vadd.f32 %v1864, %v1865
        %v1867 = vrot.slane %v1866, 1
        %v1868 = vadd.f32 %v1866, %v1867
        %s1869 = vtos %v1868
        %v1878 = vcombine.low %v1615, %v1622
        %v1879 = vcombine.low %v1629, %v1636
        %v1880 = vcombine.low %v1643, %v1650
        %v1881 = vcombine.low %v1657, %v1664
        %v1883 = vunpack.c.l.s4 1966171168
        %v1884 = vunpack.c.0.s8 %v1883
        %v1885 = vlaneseq
        %v1886 = vshrl.u32 %v1885, 7
        %v1887 = vsub.s32 %v1884, %v1886
        %v1888 = vrot.slane %v1878, %v1887
        %v1890 = vunpack.c.l.s4 1966171168
        %v1891 = vunpack.c.0.s8 %v1890
        %v1892 = vlaneseq
        %v1893 = vshrl.u32 %v1892, 7
        %v1894 = vsub.s32 %v1891, %v1893
        %v1895 = vrot.slane %v1879, %v1894
        %v1897 = vunpack.c.l.s4 1966171168
        %v1898 = vunpack.c.0.s8 %v1897
        %v1899 = vlaneseq
        %v1900 = vshrl.u32 %v1899, 7
        %v1901 = vsub.s32 %v1898, %v1900
        %v1902 = vrot.slane %v1880, %v1901
        %v1904 = vunpack.c.l.s4 1966171168
        %v1905 = vunpack.c.0.s8 %v1904
        %v1906 = vlaneseq
        %v1907 = vshrl.u32 %v1906, 7
        %v1908 = vsub.s32 %v1905, %v1907
        %v1909 = vrot.slane %v1881, %v1908
        %v1910 = vcombine.low %v1888, %v1895
        %v1911 = vcombine.low %v1902, %v1909
        %v1913 = vunpack.c.l.s4 1966171168
        %v1914 = vunpack.c.0.s8 %v1913
        %v1915 = vlaneseq
        %v1916 = vshrl.u32 %v1915, 7
        %v1917 = vsub.s32 %v1914, %v1916
        %v1918 = vrot.slane %v1910, %v1917
        %v1920 = vunpack.c.l.s4 1966171168
        %v1921 = vunpack.c.0.s8 %v1920
        %v1922 = vlaneseq
        %v1923 = vshrl.u32 %v1922, 7
        %v1924 = vsub.s32 %v1921, %v1923
        %v1925 = vrot.slane %v1911, %v1924
        %v1926 = vcombine.low %v1918, %v1925
        %v1928 = vmul.f32 %v1671, %v1926
        %v1930 = vlaneseq
        %v1931 = vshrl.u32 %v1930, 7
        %v1932 = vsub.s32 0, %v1931
        %v1933 = vrot.slane %v1928, %v1932
        %v1934 = vlaneseq
        %v1935 = vshrl.u32 %v1934, 7
        %v1936 = vsub.s32 1, %v1935
        %v1937 = vrot.slane %v1928, %v1936
        %v1938 = vlaneseq
        %v1939 = vshrl.u32 %v1938, 7
        %v1940 = vsub.s32 2, %v1939
        %v1941 = vrot.slane %v1928, %v1940
        %v1942 = vlaneseq
        %v1943 = vshrl.u32 %v1942, 7
        %v1944 = vsub.s32 3, %v1943
        %v1945 = vrot.slane %v1928, %v1944
        %v1946 = vlaneseq
        %v1947 = vshrl.u32 %v1946, 7
        %v1948 = vsub.s32 4, %v1947
        %v1949 = vrot.slane %v1928, %v1948
        %v1950 = vlaneseq
        %v1951 = vshrl.u32 %v1950, 7
        %v1952 = vsub.s32 5, %v1951
        %v1953 = vrot.slane %v1928, %v1952
        %v1954 = vlaneseq
        %v1955 = vshrl.u32 %v1954, 7
        %v1956 = vsub.s32 6, %v1955
        %v1957 = vrot.slane %v1928, %v1956
        %v1958 = vlaneseq
        %v1959 = vshrl.u32 %v1958, 7
        %v1960 = vsub.s32 7, %v1959
        %v1961 = vrot.slane %v1928, %v1960
        %v1970 = vsel %vm1715, %v1933, 0.0
        %v1971 = vsel %vm1715, %v1937, 0.0
        %v1972 = vadd.f32 %v1970, %v1971
        %v1973 = vsel %vm1715, %v1941, 0.0
        %v1974 = vadd.f32 %v1972, %v1973
        %v1975 = vsel %vm1715, %v1945, 0.0
        %v1976 = vadd.f32 %v1974, %v1975
        %v1977 = vsel %vm1715, %v1949, 0.0
        %v1978 = vadd.f32 %v1976, %v1977
        %v1979 = vsel %vm1715, %v1953, 0.0
        %v1980 = vadd.f32 %v1978, %v1979
        %v1981 = vsel %vm1715, %v1957, 0.0
        %v1982 = vadd.f32 %v1980, %v1981
        %v1983 = vsel %vm1715, %v1961, 0.0
        %v1984 = vadd.f32 %v1982, %v1983
        %1985 = vadd.xlane.f32.xlu0 %v1984
        %v1986 = vpop.xlane.xlu0 %1985
        %v1987 = vrot.slane %v1986, 4
        %v1988 = vadd.f32 %v1986, %v1987
        %v1989 = vrot.slane %v1988, 2
        %v1990 = vadd.f32 %v1988, %v1989
        %v1991 = vrot.slane %v1990, 1
        %v1992 = vadd.f32 %v1990, %v1991
        %s1993 = vtos %v1992
        %v1994 = vlaneseq
        %v1995 = vshrl.u32 %v1994, 7
        %vm1996 = vcmp.eq.s32.totalorder %v1995, 0
        %v1997 = vstv %s1739
        %v1998 = vsel %vm1996, %v1997, 0.0
        %vm1999 = vcmp.eq.s32.totalorder %v1995, 1
        %v2000 = vstv %s1804
        %v2001 = vsel %vm1999, %v2000, 0.0
        %v2002 = vadd.f32 %v1998, %v2001
        %vm2003 = vcmp.eq.s32.totalorder %v1995, 2
        %v2004 = vstv %s1869
        %v2005 = vsel %vm2003, %v2004, 0.0
        %v2006 = vadd.f32 %v2002, %v2005
        %vm2007 = vcmp.eq.s32.totalorder %v1995, 3
        %v2008 = vstv %s1993
        %v2009 = vsel %vm2007, %v2008, 0.0
        %v2010 = vadd.f32 %v2006, %v2009
        %2011 = vst [vmem:[%s270] sm:$0xff] %v2010
        %p2012 = scmp.lt.s32.totalorder %s17, 1
        %s2013 = scalar_select %p2012, %s17, 1
        %s2014 = smul.addr %s2013, 8
        %s2015 = scalar_lea.vmem %s5, %s2014
        // Predicated region
        $region67: #{surface_loss.1} parent=54 // pred_check
          %p2016 = pneg %p134
        $region68: #{surface_loss.1} parent=54 // pred_check_branch
          %2018 = sbr.rel (%p2016) target = $region70
        $region69: #{surface_loss.1} parent=54 // pred_region
          _
        $region70: #{surface_loss.1} parent=54 // pred_fallthru
          _
      $region55: #{surface_loss.1} parent=5 // pred_fallthru
        _
      %p2019 = scmp.le.s32.totalorder 2, %s12
      // Predicated region
      $region71: #{surface_loss.1} parent=5 // pred_check
        %p2020 = pneg %p2019
      $region72: #{surface_loss.1} parent=5 // pred_check_branch
        %2022 = sbr.rel (%p2020) target = $region74
      $region73: #{surface_loss.1} parent=5 // pred_region
        %s2023 = ssub.s32 %s12, 2
        // Predicated region
        $region75: #{surface_loss.1} parent=73 // pred_check
          %p2024 = pneg %p140
        $region76: #{surface_loss.1} parent=73 // pred_check_branch
          %2026 = sbr.rel (%p2024) target = $region78
        $region77: #{surface_loss.1} parent=73 // pred_region
          %p2027 = scmp.lt.s32.totalorder %s18, 1
          %s2028 = scalar_select %p2027, %s18, 1
          %s2029 = smul.addr %s2028, 8
          %s2030 = scalar_lea.vmem %s5, %s2029
        $region78: #{surface_loss.1} parent=73 // pred_fallthru
          _
      $region74: #{surface_loss.1} parent=5 // pred_fallthru
        _
    $region6: #{surface_loss.1} parent=1 // loop_footer
      %s16 = sadd.s32 1, %s12
    $region7: #{surface_loss.1} parent=1 // loop_footer_branch
      %11 = sbr.rel target = $region3
    $region8: #{surface_loss.1} parent=1 // loop_exit
      _

</llo_original>
